<compile_context>
chip_gen: v5e
topology: v5e:2x2
jax: 0.10.0
libtpu: 0.0.40
codegen_flags: <defaults>
</compile_context>

<pallas_src>
import functools

import jax
import jax.numpy as jnp
from jax.experimental import pallas as pl
from jax.experimental.pallas import tpu as pltpu


def _bottleneck_kernel(x_ref, w1_ref, b1_ref, w2_ref, b2_ref, w3_ref, b3_ref,
                       out_ref, *, H, W, P):
    """One batch element per grid step.

    x_ref   : (1, H*W, Cin)  bf16 input (flattened NHWC)
    w1_ref  : (Cin, P)       bf16 conv1 1x1 weight (BN1 scale folded in)
    w2_ref  : (9, P, P)      bf16 conv2 3x3 weight, tap ky*3+kx as (in, out),
                             BN2 scale folded in
    w3_ref  : (P, 4P)        bf16 conv3 1x1 weight (BN3 scale folded in)
    b*_ref  : (1, C)         f32 folded BN bias
    out_ref : (1, H*W, 4P)   f32 output
    """
    HW = H * W
    x_bf = x_ref[0]                                   # (HW, Cin) bf16
    x_f32 = x_bf.astype(jnp.float32)                  # residual (f32 epilogue)

    # --- conv1 (1x1) + BN1 bias + ReLU (f32) --------------------------------
    h1 = jnp.dot(x_bf, w1_ref[...], preferred_element_type=jnp.float32)
    h1 = jnp.maximum(h1 + b1_ref[...], 0.0)           # (HW, P) f32

    # --- conv2 (3x3, stride 1, pad 1) + BN2 bias + ReLU ---------------------
    # Shifted windows of h1 built in-register: column (dx) shift via XLU roll
    # on the sublane axis + boundary mask; row (dy) shift via aligned slice +
    # zero-row concat.  No padded scratch, no strided reshape copies.
    col = jax.lax.broadcasted_iota(jnp.int32, (HW, P), 0) % W

    def col_shift(a, dx):
        # a[y, x] -> a[y, x + dx], zero outside the row.
        if dx == 0:
            return a
        rolled = pltpu.roll(a, shift=(-dx) % HW, axis=0)   # rolled[f] = a[f+dx]
        valid = (col >= 1) if dx < 0 else (col <= W - 2)
        return jnp.where(valid, rolled, 0.0)

    def row_shift(a, dy):
        # a[y, x] -> a[y + dy, x], zero outside the image.
        if dy == 0:
            return a
        zeros_row = jnp.zeros((W, P), jnp.float32)
        if dy > 0:
            return jnp.concatenate([a[W:], zeros_row], axis=0)      # a[f + W]
        return jnp.concatenate([zeros_row, a[:HW - W]], axis=0)     # a[f - W]

    cols = {dx: col_shift(h1, dx) for dx in (-1, 0, 1)}

    acc = None
    for ky in range(3):
        for kx in range(3):
            win = row_shift(cols[kx - 1], ky - 1).astype(jnp.bfloat16)
            tap = jnp.dot(win, w2_ref[ky * 3 + kx],
                          preferred_element_type=jnp.float32)
            acc = tap if acc is None else acc + tap
    h2 = jnp.maximum(acc + b2_ref[...], 0.0)           # (HW, P) f32

    # --- conv3 (1x1) + BN3 bias + residual + ReLU ---------------------------
    h3 = jnp.dot(h2.astype(jnp.bfloat16), w3_ref[...],
                 preferred_element_type=jnp.float32)
    out_ref[0] = jnp.maximum(h3 + b3_ref[...] + x_f32, 0.0)


def bottleneck_pallas(x_nchw, params):
    N, Cin, H, W = x_nchw.shape
    P = params["w1"].shape[1]
    Cout = params["w3"].shape[1]
    assert Cout == Cin, "identity residual requires inplanes == planes * 4"

    # NCHW -> NHWC -> (N, H*W, C), bf16 for the MXU / halved HBM read traffic.
    x = jnp.transpose(x_nchw, (0, 2, 3, 1)).reshape(N, H * W, Cin)
    x = x.astype(jnp.bfloat16)

    kernel = functools.partial(_bottleneck_kernel, H=H, W=W, P=P)

    def full_spec(shape):
        zeros = (0,) * len(shape)
        return pl.BlockSpec(shape, lambda n, _z=zeros: _z)

    out = pl.pallas_call(
        kernel,
        out_shape=jax.ShapeDtypeStruct((N, H * W, Cout), jnp.float32),
        grid=(N,),
        in_specs=[
            pl.BlockSpec((1, H * W, Cin), lambda n: (n, 0, 0)),
            full_spec((Cin, P)), full_spec((1, P)),
            full_spec((9, P, P)), full_spec((1, P)),
            full_spec((P, Cout)), full_spec((1, Cout)),
        ],
        out_specs=pl.BlockSpec((1, H * W, Cout), lambda n: (n, 0, 0)),
        compiler_params=pltpu.CompilerParams(
            dimension_semantics=("parallel",)),
    )(x, params["w1"], params["b1"],
      params["w2"], params["b2"],
      params["w3"], params["b3"])

    # (N, H*W, Cout) -> NCHW
    return out.reshape(N, H, W, Cout).transpose(0, 3, 1, 2)


def make_params(key, inplanes, planes, eps=1e-5):
    """Synthetic parameters: PyTorch layouts + kernel-ready (BN-folded, bf16)."""
    ks = jax.random.split(key, 6)
    cw1 = jax.random.normal(ks[0], (planes, inplanes, 1, 1), jnp.float32) * 0.1
    cw2 = jax.random.normal(ks[1], (planes, planes, 3, 3), jnp.float32) * 0.1
    cw3 = jax.random.normal(ks[2], (planes * 4, planes, 1, 1), jnp.float32) * 0.1

    def make_bn(k, c):
        k1, k2, k3, k4 = jax.random.split(k, 4)
        gamma = jax.random.uniform(k1, (c,), jnp.float32, 0.5, 1.5)
        beta = jax.random.normal(k2, (c,), jnp.float32) * 0.1
        mean = jax.random.normal(k3, (c,), jnp.float32) * 0.1
        var = jax.random.uniform(k4, (c,), jnp.float32, 0.5, 1.5)
        scale = gamma / jnp.sqrt(var + eps)
        bias = beta - mean * scale
        return (gamma, beta, mean, var), scale, bias

    bn1, s1, b1 = make_bn(ks[3], planes)
    bn2, s2, b2 = make_bn(ks[4], planes)
    bn3, s3, b3 = make_bn(ks[5], planes * 4)

    # Fold BN scale into conv weights along the output-channel axis; cast bf16.
    w1 = (cw1[:, :, 0, 0].T * s1[None, :]).astype(jnp.bfloat16)        # (Cin, P)
    w2 = jnp.stack([cw2[:, :, ky, kx].T * s2[None, :]                  # (9, P, P)
                    for ky in range(3) for kx in range(3)]).astype(jnp.bfloat16)
    w3 = (cw3[:, :, 0, 0].T * s3[None, :]).astype(jnp.bfloat16)        # (P, 4P)

    kernel_params = {
        "w1": w1, "b1": b1[None, :].astype(jnp.float32),
        "w2": w2, "b2": b2[None, :].astype(jnp.float32),
        "w3": w3, "b3": b3[None, :].astype(jnp.float32),
    }
    torch_params = (cw1, cw2, cw3, bn1, bn2, bn3)
    return kernel_params, torch_params


def ref_bottleneck(x, cw1, cw2, cw3, bn1, bn2, bn3, eps=1e-5):
    """Pure-JAX f32 reference mirroring the PyTorch forward (eval-mode BN)."""
    def conv(x, w, pad):
        return jax.lax.conv_general_dilated(
            x, w, window_strides=(1, 1), padding=[(pad, pad), (pad, pad)],
            dimension_numbers=("NCHW", "OIHW", "NCHW"))

    def bn(x, p):
        g, b, m, v = p
        inv = g / jnp.sqrt(v + eps)
        return x * inv[None, :, None, None] + (b - m * inv)[None, :, None, None]

    out = jax.nn.relu(bn(conv(x, cw1, 0), bn1))
    out = jax.nn.relu(bn(conv(out, cw2, 1), bn2))
    out = bn(conv(out, cw3, 0), bn3)
    return jax.nn.relu(out + x)


if __name__ == "__main__":
    planes = 4
    inplanes = planes * 4          # identity residual path (downsample=None)
    N, H, W = 2, 16, 16

    key = jax.random.PRNGKey(0)
    kx, kp = jax.random.split(key)
    x = jax.random.normal(kx, (N, inplanes, H, W), jnp.float32)
    kernel_params, torch_params = make_params(kp, inplanes, planes)

    out = bottleneck_pallas(x, kernel_params)
    out = jax.block_until_ready(out)

    ref = ref_bottleneck(x, *torch_params)
    assert out.shape == ref.shape == (N, planes * 4, H, W)
    max_err = float(jnp.max(jnp.abs(out - ref)))
    # bf16 matmul path vs f32 reference -> loosened tolerance (per review).
    assert jnp.allclose(out, ref, rtol=5e-2, atol=5e-2), f"max abs err {max_err}"

    print("KERNEL_OK")
</pallas_src>

<mosaic_0001>
module attributes {stable_mosaic.version = 11 : i64} {
  func.func @_bottleneck_kernel(%arg0: i32, %arg1: memref<1x256x16xbf16, #tpu.memory_space<vmem>>, %arg2: memref<16x4xbf16, #tpu.memory_space<vmem>>, %arg3: memref<1x4xf32, #tpu.memory_space<vmem>>, %arg4: memref<9x4x4xbf16, #tpu.memory_space<vmem>>, %arg5: memref<1x4xf32, #tpu.memory_space<vmem>>, %arg6: memref<4x16xbf16, #tpu.memory_space<vmem>>, %arg7: memref<1x16xf32, #tpu.memory_space<vmem>>, %arg8: memref<1x256x16xf32, #tpu.memory_space<vmem>>) attributes {dimension_semantics = [#tpu.dimension_semantics<parallel>], iteration_bounds = array<i64: 2>, scalar_prefetch = 0 : i64, scratch_operands = 0 : i64, tpu.core_type = #tpu.core_type<tc>, window_params = [{transform_indices = @transform_0, window_bounds = array<i64: 1, 256, 16>}, {pipeline_mode = #tpu.pipeline_mode<synchronous>, transform_indices = @transform_1, window_bounds = array<i64: 16, 4>}, {pipeline_mode = #tpu.pipeline_mode<synchronous>, transform_indices = @transform_2, window_bounds = array<i64: 1, 4>}, {pipeline_mode = #tpu.pipeline_mode<synchronous>, transform_indices = @transform_3, window_bounds = array<i64: 9, 4, 4>}, {pipeline_mode = #tpu.pipeline_mode<synchronous>, transform_indices = @transform_4, window_bounds = array<i64: 1, 4>}, {pipeline_mode = #tpu.pipeline_mode<synchronous>, transform_indices = @transform_5, window_bounds = array<i64: 4, 16>}, {pipeline_mode = #tpu.pipeline_mode<synchronous>, transform_indices = @transform_6, window_bounds = array<i64: 1, 16>}, {transform_indices = @transform_7, window_bounds = array<i64: 1, 256, 16>}]} {
    %c0 = arith.constant 0 : index
    %c0_0 = arith.constant 0 : index
    %c0_1 = arith.constant 0 : index
    %0 = vector.load %arg1[%c0, %c0_0, %c0_1] : memref<1x256x16xbf16, #tpu.memory_space<vmem>>, vector<1x256x16xbf16>
    %1 = vector.shape_cast %0 : vector<1x256x16xbf16> to vector<256x16xbf16>
    %2 = arith.extf %1 : vector<256x16xbf16> to vector<256x16xf32>
    %c0_2 = arith.constant 0 : index
    %c0_3 = arith.constant 0 : index
    %3 = vector.load %arg2[%c0_2, %c0_3] : memref<16x4xbf16, #tpu.memory_space<vmem>>, vector<16x4xbf16>
    %cst = arith.constant dense<0.000000e+00> : vector<256x4xf32>
    %4 = tpu.matmul %1, %3, %cst {dimension_numbers = #tpu.dot_dimension_numbers<[1], [0], [0], [1], [0, 0, 1, 1], [], []>} : vector<256x16xbf16>, vector<16x4xbf16>, vector<256x4xf32> -> vector<256x4xf32>
    %c0_4 = arith.constant 0 : index
    %c0_5 = arith.constant 0 : index
    %5 = vector.load %arg3[%c0_4, %c0_5] : memref<1x4xf32, #tpu.memory_space<vmem>>, vector<1x4xf32>
    %6 = vector.broadcast %5 : vector<1x4xf32> to vector<256x4xf32>
    %7 = arith.addf %4, %6 : vector<256x4xf32>
    %cst_6 = arith.constant 0.000000e+00 : f32
    %8 = vector.broadcast %cst_6 : f32 to vector<256x4xf32>
    %9 = arith.maximumf %7, %8 : vector<256x4xf32>
    %10 = tpu.iota {dimensions = array<i32: 0>} : vector<256x4xi32>
    %c16_i32 = arith.constant 16 : i32
    %c0_i32 = arith.constant 0 : i32
    %11 = arith.cmpi eq, %c16_i32, %c0_i32 : i32
    %c1_i32 = arith.constant 1 : i32
    %12 = arith.select %11, %c1_i32, %c16_i32 : i32
    %13 = vector.broadcast %12 : i32 to vector<256x4xi32>
    %14 = arith.remsi %10, %13 : vector<256x4xi32>
    %c0_i32_7 = arith.constant 0 : i32
    %15 = vector.broadcast %c0_i32_7 : i32 to vector<256x4xi32>
    %16 = arith.cmpi ne, %14, %15 : vector<256x4xi32>
    %c0_i32_8 = arith.constant 0 : i32
    %17 = vector.broadcast %c0_i32_8 : i32 to vector<256x4xi32>
    %18 = arith.cmpi slt, %14, %17 : vector<256x4xi32>
    %c0_i32_9 = arith.constant 0 : i32
    %19 = arith.cmpi slt, %12, %c0_i32_9 : i32
    %20 = vector.broadcast %19 : i1 to vector<256x4xi1>
    %21 = vector.broadcast %20 : vector<256x4xi1> to vector<256x4xi1>
    %22 = arith.xori %18, %21 : vector<256x4xi1>
    %23 = arith.andi %22, %16 : vector<256x4xi1>
    %24 = vector.broadcast %12 : i32 to vector<256x4xi32>
    %25 = arith.addi %14, %24 : vector<256x4xi32>
    %26 = arith.select %23, %25, %14 : vector<256x4xi1>, vector<256x4xi32>
    %c1_i32_10 = arith.constant 1 : i32
    %27 = tpu.dynamic_rotate %9 by %c1_i32_10 dim 0 : vector<256x4xf32>, i32 -> vector<256x4xf32>
    %c1_i32_11 = arith.constant 1 : i32
    %28 = vector.broadcast %c1_i32_11 : i32 to vector<256x4xi32>
    %29 = arith.cmpi sge, %26, %28 : vector<256x4xi32>
    %cst_12 = arith.constant 0.000000e+00 : f32
    %30 = vector.broadcast %cst_12 : f32 to vector<256x4xf32>
    %31 = arith.select %29, %27, %30 : vector<256x4xi1>, vector<256x4xf32>
    %c255_i32 = arith.constant 255 : i32
    %32 = tpu.dynamic_rotate %9 by %c255_i32 dim 0 : vector<256x4xf32>, i32 -> vector<256x4xf32>
    %c14_i32 = arith.constant 14 : i32
    %33 = vector.broadcast %c14_i32 : i32 to vector<256x4xi32>
    %34 = arith.cmpi sle, %26, %33 : vector<256x4xi32>
    %cst_13 = arith.constant 0.000000e+00 : f32
    %35 = vector.broadcast %cst_13 : f32 to vector<256x4xf32>
    %36 = arith.select %34, %32, %35 : vector<256x4xi1>, vector<256x4xf32>
    %cst_14 = arith.constant 0.000000e+00 : f32
    %37 = vector.broadcast %cst_14 : f32 to vector<16x4xf32>
    %38 = vector.extract_strided_slice %31 {offsets = [0, 0], sizes = [240, 4], strides = [1, 1]} : vector<256x4xf32> to vector<240x4xf32>
    %39 = tpu.concatenate %37, %38 in 0 : vector<16x4xf32>, vector<240x4xf32> -> vector<256x4xf32>
    %40 = arith.truncf %39 : vector<256x4xf32> to vector<256x4xbf16>
    %c0_15 = arith.constant 0 : index
    %c0_16 = arith.constant 0 : index
    %c0_17 = arith.constant 0 : index
    %41 = vector.load %arg4[%c0_15, %c0_16, %c0_17] : memref<9x4x4xbf16, #tpu.memory_space<vmem>>, vector<1x4x4xbf16>
    %42 = vector.shape_cast %41 : vector<1x4x4xbf16> to vector<4x4xbf16>
    %cst_18 = arith.constant dense<0.000000e+00> : vector<256x4xf32>
    %43 = tpu.matmul %40, %42, %cst_18 {dimension_numbers = #tpu.dot_dimension_numbers<[1], [0], [0], [1], [0, 0, 1, 1], [], []>} : vector<256x4xbf16>, vector<4x4xbf16>, vector<256x4xf32> -> vector<256x4xf32>
    %cst_19 = arith.constant 0.000000e+00 : f32
    %44 = vector.broadcast %cst_19 : f32 to vector<16x4xf32>
    %45 = vector.extract_strided_slice %9 {offsets = [0, 0], sizes = [240, 4], strides = [1, 1]} : vector<256x4xf32> to vector<240x4xf32>
    %46 = tpu.concatenate %44, %45 in 0 : vector<16x4xf32>, vector<240x4xf32> -> vector<256x4xf32>
    %47 = arith.truncf %46 : vector<256x4xf32> to vector<256x4xbf16>
    %c1 = arith.constant 1 : index
    %c0_20 = arith.constant 0 : index
    %c0_21 = arith.constant 0 : index
    %48 = vector.load %arg4[%c1, %c0_20, %c0_21] : memref<9x4x4xbf16, #tpu.memory_space<vmem>>, vector<1x4x4xbf16>
    %49 = vector.shape_cast %48 : vector<1x4x4xbf16> to vector<4x4xbf16>
    %cst_22 = arith.constant dense<0.000000e+00> : vector<256x4xf32>
    %50 = tpu.matmul %47, %49, %cst_22 {dimension_numbers = #tpu.dot_dimension_numbers<[1], [0], [0], [1], [0, 0, 1, 1], [], []>} : vector<256x4xbf16>, vector<4x4xbf16>, vector<256x4xf32> -> vector<256x4xf32>
    %51 = arith.addf %43, %50 : vector<256x4xf32>
    %cst_23 = arith.constant 0.000000e+00 : f32
    %52 = vector.broadcast %cst_23 : f32 to vector<16x4xf32>
    %53 = vector.extract_strided_slice %36 {offsets = [0, 0], sizes = [240, 4], strides = [1, 1]} : vector<256x4xf32> to vector<240x4xf32>
    %54 = tpu.concatenate %52, %53 in 0 : vector<16x4xf32>, vector<240x4xf32> -> vector<256x4xf32>
    %55 = arith.truncf %54 : vector<256x4xf32> to vector<256x4xbf16>
    %c2 = arith.constant 2 : index
    %c0_24 = arith.constant 0 : index
    %c0_25 = arith.constant 0 : index
    %56 = vector.load %arg4[%c2, %c0_24, %c0_25] : memref<9x4x4xbf16, #tpu.memory_space<vmem>>, vector<1x4x4xbf16>
    %57 = vector.shape_cast %56 : vector<1x4x4xbf16> to vector<4x4xbf16>
    %cst_26 = arith.constant dense<0.000000e+00> : vector<256x4xf32>
    %58 = tpu.matmul %55, %57, %cst_26 {dimension_numbers = #tpu.dot_dimension_numbers<[1], [0], [0], [1], [0, 0, 1, 1], [], []>} : vector<256x4xbf16>, vector<4x4xbf16>, vector<256x4xf32> -> vector<256x4xf32>
    %59 = arith.addf %51, %58 : vector<256x4xf32>
    %60 = arith.truncf %31 : vector<256x4xf32> to vector<256x4xbf16>
    %c3 = arith.constant 3 : index
    %c0_27 = arith.constant 0 : index
    %c0_28 = arith.constant 0 : index
    %61 = vector.load %arg4[%c3, %c0_27, %c0_28] : memref<9x4x4xbf16, #tpu.memory_space<vmem>>, vector<1x4x4xbf16>
    %62 = vector.shape_cast %61 : vector<1x4x4xbf16> to vector<4x4xbf16>
    %cst_29 = arith.constant dense<0.000000e+00> : vector<256x4xf32>
    %63 = tpu.matmul %60, %62, %cst_29 {dimension_numbers = #tpu.dot_dimension_numbers<[1], [0], [0], [1], [0, 0, 1, 1], [], []>} : vector<256x4xbf16>, vector<4x4xbf16>, vector<256x4xf32> -> vector<256x4xf32>
    %64 = arith.addf %59, %63 : vector<256x4xf32>
    %65 = arith.truncf %9 : vector<256x4xf32> to vector<256x4xbf16>
    %c4 = arith.constant 4 : index
    %c0_30 = arith.constant 0 : index
    %c0_31 = arith.constant 0 : index
    %66 = vector.load %arg4[%c4, %c0_30, %c0_31] : memref<9x4x4xbf16, #tpu.memory_space<vmem>>, vector<1x4x4xbf16>
    %67 = vector.shape_cast %66 : vector<1x4x4xbf16> to vector<4x4xbf16>
    %cst_32 = arith.constant dense<0.000000e+00> : vector<256x4xf32>
    %68 = tpu.matmul %65, %67, %cst_32 {dimension_numbers = #tpu.dot_dimension_numbers<[1], [0], [0], [1], [0, 0, 1, 1], [], []>} : vector<256x4xbf16>, vector<4x4xbf16>, vector<256x4xf32> -> vector<256x4xf32>
    %69 = arith.addf %64, %68 : vector<256x4xf32>
    %70 = arith.truncf %36 : vector<256x4xf32> to vector<256x4xbf16>
    %c5 = arith.constant 5 : index
    %c0_33 = arith.constant 0 : index
    %c0_34 = arith.constant 0 : index
    %71 = vector.load %arg4[%c5, %c0_33, %c0_34] : memref<9x4x4xbf16, #tpu.memory_space<vmem>>, vector<1x4x4xbf16>
    %72 = vector.shape_cast %71 : vector<1x4x4xbf16> to vector<4x4xbf16>
    %cst_35 = arith.constant dense<0.000000e+00> : vector<256x4xf32>
    %73 = tpu.matmul %70, %72, %cst_35 {dimension_numbers = #tpu.dot_dimension_numbers<[1], [0], [0], [1], [0, 0, 1, 1], [], []>} : vector<256x4xbf16>, vector<4x4xbf16>, vector<256x4xf32> -> vector<256x4xf32>
    %74 = arith.addf %69, %73 : vector<256x4xf32>
    %cst_36 = arith.constant 0.000000e+00 : f32
    %75 = vector.broadcast %cst_36 : f32 to vector<16x4xf32>
    %76 = vector.extract_strided_slice %31 {offsets = [16, 0], sizes = [240, 4], strides = [1, 1]} : vector<256x4xf32> to vector<240x4xf32>
    %77 = tpu.concatenate %76, %75 in 0 : vector<240x4xf32>, vector<16x4xf32> -> vector<256x4xf32>
    %78 = arith.truncf %77 : vector<256x4xf32> to vector<256x4xbf16>
    %c6 = arith.constant 6 : index
    %c0_37 = arith.constant 0 : index
    %c0_38 = arith.constant 0 : index
    %79 = vector.load %arg4[%c6, %c0_37, %c0_38] : memref<9x4x4xbf16, #tpu.memory_space<vmem>>, vector<1x4x4xbf16>
    %80 = vector.shape_cast %79 : vector<1x4x4xbf16> to vector<4x4xbf16>
    %cst_39 = arith.constant dense<0.000000e+00> : vector<256x4xf32>
    %81 = tpu.matmul %78, %80, %cst_39 {dimension_numbers = #tpu.dot_dimension_numbers<[1], [0], [0], [1], [0, 0, 1, 1], [], []>} : vector<256x4xbf16>, vector<4x4xbf16>, vector<256x4xf32> -> vector<256x4xf32>
    %82 = arith.addf %74, %81 : vector<256x4xf32>
    %cst_40 = arith.constant 0.000000e+00 : f32
    %83 = vector.broadcast %cst_40 : f32 to vector<16x4xf32>
    %84 = vector.extract_strided_slice %9 {offsets = [16, 0], sizes = [240, 4], strides = [1, 1]} : vector<256x4xf32> to vector<240x4xf32>
    %85 = tpu.concatenate %84, %83 in 0 : vector<240x4xf32>, vector<16x4xf32> -> vector<256x4xf32>
    %86 = arith.truncf %85 : vector<256x4xf32> to vector<256x4xbf16>
    %c7 = arith.constant 7 : index
    %c0_41 = arith.constant 0 : index
    %c0_42 = arith.constant 0 : index
    %87 = vector.load %arg4[%c7, %c0_41, %c0_42] : memref<9x4x4xbf16, #tpu.memory_space<vmem>>, vector<1x4x4xbf16>
    %88 = vector.shape_cast %87 : vector<1x4x4xbf16> to vector<4x4xbf16>
    %cst_43 = arith.constant dense<0.000000e+00> : vector<256x4xf32>
    %89 = tpu.matmul %86, %88, %cst_43 {dimension_numbers = #tpu.dot_dimension_numbers<[1], [0], [0], [1], [0, 0, 1, 1], [], []>} : vector<256x4xbf16>, vector<4x4xbf16>, vector<256x4xf32> -> vector<256x4xf32>
    %90 = arith.addf %82, %89 : vector<256x4xf32>
    %cst_44 = arith.constant 0.000000e+00 : f32
    %91 = vector.broadcast %cst_44 : f32 to vector<16x4xf32>
    %92 = vector.extract_strided_slice %36 {offsets = [16, 0], sizes = [240, 4], strides = [1, 1]} : vector<256x4xf32> to vector<240x4xf32>
    %93 = tpu.concatenate %92, %91 in 0 : vector<240x4xf32>, vector<16x4xf32> -> vector<256x4xf32>
    %94 = arith.truncf %93 : vector<256x4xf32> to vector<256x4xbf16>
    %c8 = arith.constant 8 : index
    %c0_45 = arith.constant 0 : index
    %c0_46 = arith.constant 0 : index
    %95 = vector.load %arg4[%c8, %c0_45, %c0_46] : memref<9x4x4xbf16, #tpu.memory_space<vmem>>, vector<1x4x4xbf16>
    %96 = vector.shape_cast %95 : vector<1x4x4xbf16> to vector<4x4xbf16>
    %cst_47 = arith.constant dense<0.000000e+00> : vector<256x4xf32>
    %97 = tpu.matmul %94, %96, %cst_47 {dimension_numbers = #tpu.dot_dimension_numbers<[1], [0], [0], [1], [0, 0, 1, 1], [], []>} : vector<256x4xbf16>, vector<4x4xbf16>, vector<256x4xf32> -> vector<256x4xf32>
    %98 = arith.addf %90, %97 : vector<256x4xf32>
    %c0_48 = arith.constant 0 : index
    %c0_49 = arith.constant 0 : index
    %99 = vector.load %arg5[%c0_48, %c0_49] : memref<1x4xf32, #tpu.memory_space<vmem>>, vector<1x4xf32>
    %100 = vector.broadcast %99 : vector<1x4xf32> to vector<256x4xf32>
    %101 = arith.addf %98, %100 : vector<256x4xf32>
    %cst_50 = arith.constant 0.000000e+00 : f32
    %102 = vector.broadcast %cst_50 : f32 to vector<256x4xf32>
    %103 = arith.maximumf %101, %102 : vector<256x4xf32>
    %104 = arith.truncf %103 : vector<256x4xf32> to vector<256x4xbf16>
    %c0_51 = arith.constant 0 : index
    %c0_52 = arith.constant 0 : index
    %105 = vector.load %arg6[%c0_51, %c0_52] : memref<4x16xbf16, #tpu.memory_space<vmem>>, vector<4x16xbf16>
    %cst_53 = arith.constant dense<0.000000e+00> : vector<256x16xf32>
    %106 = tpu.matmul %104, %105, %cst_53 {dimension_numbers = #tpu.dot_dimension_numbers<[1], [0], [0], [1], [0, 0, 1, 1], [], []>} : vector<256x4xbf16>, vector<4x16xbf16>, vector<256x16xf32> -> vector<256x16xf32>
    %c0_54 = arith.constant 0 : index
    %c0_55 = arith.constant 0 : index
    %107 = vector.load %arg7[%c0_54, %c0_55] : memref<1x16xf32, #tpu.memory_space<vmem>>, vector<1x16xf32>
    %108 = vector.broadcast %107 : vector<1x16xf32> to vector<256x16xf32>
    %109 = arith.addf %106, %108 : vector<256x16xf32>
    %110 = arith.addf %109, %2 : vector<256x16xf32>
    %cst_56 = arith.constant 0.000000e+00 : f32
    %111 = vector.broadcast %cst_56 : f32 to vector<256x16xf32>
    %112 = arith.maximumf %110, %111 : vector<256x16xf32>
    %c0_57 = arith.constant 0 : index
    %c0_58 = arith.constant 0 : index
    %c0_59 = arith.constant 0 : index
    %113 = vector.load %arg8[%c0_57, %c0_58, %c0_59] : memref<1x256x16xf32, #tpu.memory_space<vmem>>, vector<1x256x16xf32>
    %114 = vector.shape_cast %113 : vector<1x256x16xf32> to vector<256x16xf32>
    %115 = vector.shape_cast %112 : vector<256x16xf32> to vector<1x256x16xf32>
    tpu.vector_store %arg8[%c0_57, %c0_58, %c0_59], %115 {strides = array<i32>} : memref<1x256x16xf32, #tpu.memory_space<vmem>>, vector<1x256x16xf32>,
    return
  }
  func.func @transform_0(%arg0: i32) -> (i32, i32, i32) {
    %c0_i32 = arith.constant 0 : i32
    %c0_i32_0 = arith.constant 0 : i32
    %c0_i32_1 = arith.constant 0 : i32
    return %arg0, %c0_i32, %c0_i32_0 : i32, i32, i32
  }
  func.func @transform_1(%arg0: i32) -> (i32, i32) {
    %c0_i32 = arith.constant 0 : i32
    %c0_i32_0 = arith.constant 0 : i32
    %c0_i32_1 = arith.constant 0 : i32
    return %c0_i32, %c0_i32_0 : i32, i32
  }
  func.func @transform_2(%arg0: i32) -> (i32, i32) {
    %c0_i32 = arith.constant 0 : i32
    %c0_i32_0 = arith.constant 0 : i32
    %c0_i32_1 = arith.constant 0 : i32
    return %c0_i32, %c0_i32_0 : i32, i32
  }
  func.func @transform_3(%arg0: i32) -> (i32, i32, i32) {
    %c0_i32 = arith.constant 0 : i32
    %c0_i32_0 = arith.constant 0 : i32
    %c0_i32_1 = arith.constant 0 : i32
    %c0_i32_2 = arith.constant 0 : i32
    return %c0_i32, %c0_i32_0, %c0_i32_1 : i32, i32, i32
  }
  func.func @transform_4(%arg0: i32) -> (i32, i32) {
    %c0_i32 = arith.constant 0 : i32
    %c0_i32_0 = arith.constant 0 : i32
    %c0_i32_1 = arith.constant 0 : i32
    return %c0_i32, %c0_i32_0 : i32, i32
  }
  func.func @transform_5(%arg0: i32) -> (i32, i32) {
    %c0_i32 = arith.constant 0 : i32
    %c0_i32_0 = arith.constant 0 : i32
    %c0_i32_1 = arith.constant 0 : i32
    return %c0_i32, %c0_i32_0 : i32, i32
  }
  func.func @transform_6(%arg0: i32) -> (i32, i32) {
    %c0_i32 = arith.constant 0 : i32
    %c0_i32_0 = arith.constant 0 : i32
    %c0_i32_1 = arith.constant 0 : i32
    return %c0_i32, %c0_i32_0 : i32, i32
  }
  func.func @transform_7(%arg0: i32) -> (i32, i32, i32) {
    %c0_i32 = arith.constant 0 : i32
    %c0_i32_0 = arith.constant 0 : i32
    %c0_i32_1 = arith.constant 0 : i32
    return %arg0, %c0_i32, %c0_i32_0 : i32, i32, i32
  }
}

</mosaic_0001>

<llo_original>
// kernel: tpu_custom_call.1
$region0: #{tpu_custom_call.1}
  #allocation0 [shape = 'u32[]', space=smem, size = 0x4, offset = 0x4, fixed_abs, tag = 'smem constant byte address 0x4 - core index']
  #allocation1 [shape = 'u32[72,128]{1,0:T(1,128)}', space=vmem, size = 0x9000, scoped, tag = 'internal scratch']
  %s0 = inlined_call_operand.vmem [shape: bf16[2,256,16], index: 0, kind: input, shape index: {}]
  %s1 = inlined_call_operand.vmem [shape: bf16[16,4], index: 1, kind: input, shape index: {}]
  %s2 = inlined_call_operand.vmem [shape: f32[1,4], index: 2, kind: input, shape index: {}]
  %s3 = inlined_call_operand.vmem [shape: bf16[9,4,4], index: 3, kind: input, shape index: {}]
  %s4 = inlined_call_operand.vmem [shape: f32[1,4], index: 4, kind: input, shape index: {}]
  %s5 = inlined_call_operand.vmem [shape: bf16[4,16], index: 5, kind: input, shape index: {}]
  %s6 = inlined_call_operand.vmem [shape: f32[1,16], index: 6, kind: input, shape index: {}]
  %s7 = inlined_call_operand.vmem [shape: f32[2,256,16], index: 7, kind: output, shape index: {}]
  %s8 = sld [smem:[#allocation0]]
  $region61: #{tpu_custom_call.1} parent=0
    _
  %s10 = ssub.s32 1, %s8
  %s11 = scalar_select 0, %s10, %s8
  loop: start=0, step=1, limit=4
  $region2: #{tpu_custom_call.1} parent=0 // loop_pre_header
    _
  $region3: #{tpu_custom_call.1} parent=0 // loop_header
    %s13 = sphi 0, %s17
    %p14 = scmp.ge.s32.totalorder %s13, 4
    %s23 = sphi 0, %s25
    %s26 = sphi 0, %s23
    %s27 = sphi 0, %s26
    %s43 = sphi 0, %s27
    %s47 = sphi 0, %s47
    %s49 = sphi 0, %s47
    %s50 = sphi 0, %s49
    %s64 = sphi 0, %s50
    %s68 = sphi 0, %s68
    %s70 = sphi 0, %s68
    %s71 = sphi 0, %s70
    %s85 = sphi 0, %s71
    %s89 = sphi 0, %s89
    %s91 = sphi 0, %s89
    %s92 = sphi 0, %s91
    %s106 = sphi 0, %s92
    %s110 = sphi 0, %s110
    %s112 = sphi 0, %s110
    %s113 = sphi 0, %s112
    %s127 = sphi 0, %s113
    %s131 = sphi 0, %s131
    %s133 = sphi 0, %s131
    %s134 = sphi 0, %s133
    %s148 = sphi 0, %s134
    %s152 = sphi 0, %s152
    %s154 = sphi 0, %s152
    %s155 = sphi 0, %s154
    %s169 = sphi 0, %s155
    %s175 = sphi 0, %s177
    %s178 = sphi 0, %s175
    %s179 = sphi 0, %s178
    %s195 = sphi 0, %s179
  $region4: #{tpu_custom_call.1} parent=0 // loop_header_branch
    %16 = sbr.rel (%p14) target = $region8
  $region5: #{tpu_custom_call.1} parent=0 // loop_body
    %s18 = ssub.s32 %s13, 1
    %s19 = ssub.s32 %s13, 2
    %s20 = sadd.s32 %s13, 1
    %s21 = ssub.s32 %s13, %s20
    %p22 = scmp.eq.s32.totalorder %s21, 0
    %s24 = sadd.s32 %s23, 1
    %s25 = scalar_select %p22, %s23, %s24
    %p28 = pneg %p22
    %p29 = scmp.eq.s32.totalorder %s13, 1
    %p30 = por %p28, %p29
    %p31 = scmp.ne.s32.totalorder %s23, %s26
    %p32 = scmp.eq.s32.totalorder %s13, 0
    %p33 = por %p31, %p32
    %p34 = scmp.ne.s32.totalorder %s23, %s26
    %p35 = scmp.eq.s32.totalorder %s18, 1
    %p36 = por %p34, %p35
    %p37 = scmp.ne.s32.totalorder %s26, %s27
    %p38 = scmp.eq.s32.totalorder %s18, 0
    %p39 = por %p37, %p38
    %p40 = scmp.ne.s32.totalorder %s26, %s27
    %p41 = scmp.eq.s32.totalorder %s19, 1
    %p42 = por %p40, %p41
    %p44 = scmp.ne.s32.totalorder %s27, %s43
    %p45 = scmp.eq.s32.totalorder %s19, 0
    %p46 = por %p44, %p45
    %s48 = sadd.s32 %s47, 1
    %p51 = scmp.eq.s32.totalorder %s13, 1
    %p52 = scmp.ne.s32.totalorder %s47, %s49
    %p53 = scmp.eq.s32.totalorder %s13, 0
    %p54 = por %p52, %p53
    %p55 = scmp.ne.s32.totalorder %s47, %s49
    %p56 = scmp.eq.s32.totalorder %s18, 1
    %p57 = por %p55, %p56
    %p58 = scmp.ne.s32.totalorder %s49, %s50
    %p59 = scmp.eq.s32.totalorder %s18, 0
    %p60 = por %p58, %p59
    %p61 = scmp.ne.s32.totalorder %s49, %s50
    %p62 = scmp.eq.s32.totalorder %s19, 1
    %p63 = por %p61, %p62
    %p65 = scmp.ne.s32.totalorder %s50, %s64
    %p66 = scmp.eq.s32.totalorder %s19, 0
    %p67 = por %p65, %p66
    %s69 = sadd.s32 %s68, 1
    %p72 = scmp.eq.s32.totalorder %s13, 1
    %p73 = scmp.ne.s32.totalorder %s68, %s70
    %p74 = scmp.eq.s32.totalorder %s13, 0
    %p75 = por %p73, %p74
    %p76 = scmp.ne.s32.totalorder %s68, %s70
    %p77 = scmp.eq.s32.totalorder %s18, 1
    %p78 = por %p76, %p77
    %p79 = scmp.ne.s32.totalorder %s70, %s71
    %p80 = scmp.eq.s32.totalorder %s18, 0
    %p81 = por %p79, %p80
    %p82 = scmp.ne.s32.totalorder %s70, %s71
    %p83 = scmp.eq.s32.totalorder %s19, 1
    %p84 = por %p82, %p83
    %p86 = scmp.ne.s32.totalorder %s71, %s85
    %p87 = scmp.eq.s32.totalorder %s19, 0
    %p88 = por %p86, %p87
    %s90 = sadd.s32 %s89, 1
    %p93 = scmp.eq.s32.totalorder %s13, 1
    %p94 = scmp.ne.s32.totalorder %s89, %s91
    %p95 = scmp.eq.s32.totalorder %s13, 0
    %p96 = por %p94, %p95
    %p97 = scmp.ne.s32.totalorder %s89, %s91
    %p98 = scmp.eq.s32.totalorder %s18, 1
    %p99 = por %p97, %p98
    %p100 = scmp.ne.s32.totalorder %s91, %s92
    %p101 = scmp.eq.s32.totalorder %s18, 0
    %p102 = por %p100, %p101
    %p103 = scmp.ne.s32.totalorder %s91, %s92
    %p104 = scmp.eq.s32.totalorder %s19, 1
    %p105 = por %p103, %p104
    %p107 = scmp.ne.s32.totalorder %s92, %s106
    %p108 = scmp.eq.s32.totalorder %s19, 0
    %p109 = por %p107, %p108
    %s111 = sadd.s32 %s110, 1
    %p114 = scmp.eq.s32.totalorder %s13, 1
    %p115 = scmp.ne.s32.totalorder %s110, %s112
    %p116 = scmp.eq.s32.totalorder %s13, 0
    %p117 = por %p115, %p116
    %p118 = scmp.ne.s32.totalorder %s110, %s112
    %p119 = scmp.eq.s32.totalorder %s18, 1
    %p120 = por %p118, %p119
    %p121 = scmp.ne.s32.totalorder %s112, %s113
    %p122 = scmp.eq.s32.totalorder %s18, 0
    %p123 = por %p121, %p122
    %p124 = scmp.ne.s32.totalorder %s112, %s113
    %p125 = scmp.eq.s32.totalorder %s19, 1
    %p126 = por %p124, %p125
    %p128 = scmp.ne.s32.totalorder %s113, %s127
    %p129 = scmp.eq.s32.totalorder %s19, 0
    %p130 = por %p128, %p129
    %s132 = sadd.s32 %s131, 1
    %p135 = scmp.eq.s32.totalorder %s13, 1
    %p136 = scmp.ne.s32.totalorder %s131, %s133
    %p137 = scmp.eq.s32.totalorder %s13, 0
    %p138 = por %p136, %p137
    %p139 = scmp.ne.s32.totalorder %s131, %s133
    %p140 = scmp.eq.s32.totalorder %s18, 1
    %p141 = por %p139, %p140
    %p142 = scmp.ne.s32.totalorder %s133, %s134
    %p143 = scmp.eq.s32.totalorder %s18, 0
    %p144 = por %p142, %p143
    %p145 = scmp.ne.s32.totalorder %s133, %s134
    %p146 = scmp.eq.s32.totalorder %s19, 1
    %p147 = por %p145, %p146
    %p149 = scmp.ne.s32.totalorder %s134, %s148
    %p150 = scmp.eq.s32.totalorder %s19, 0
    %p151 = por %p149, %p150
    %s153 = sadd.s32 %s152, 1
    %p156 = scmp.eq.s32.totalorder %s13, 1
    %p157 = scmp.ne.s32.totalorder %s152, %s154
    %p158 = scmp.eq.s32.totalorder %s13, 0
    %p159 = por %p157, %p158
    %p160 = scmp.ne.s32.totalorder %s152, %s154
    %p161 = scmp.eq.s32.totalorder %s18, 1
    %p162 = por %p160, %p161
    %p163 = scmp.ne.s32.totalorder %s154, %s155
    %p164 = scmp.eq.s32.totalorder %s18, 0
    %p165 = por %p163, %p164
    %p166 = scmp.ne.s32.totalorder %s154, %s155
    %p167 = scmp.eq.s32.totalorder %s19, 1
    %p168 = por %p166, %p167
    %p170 = scmp.ne.s32.totalorder %s155, %s169
    %p171 = scmp.eq.s32.totalorder %s19, 0
    %p172 = por %p170, %p171
    %s173 = ssub.s32 %s13, %s20
    %p174 = scmp.eq.s32.totalorder %s173, 0
    %s176 = sadd.s32 %s175, 1
    %s177 = scalar_select %p174, %s175, %s176
    %p180 = pneg %p174
    %p181 = scmp.eq.s32.totalorder %s13, 1
    %p182 = por %p180, %p181
    %p183 = scmp.ne.s32.totalorder %s175, %s178
    %p184 = scmp.eq.s32.totalorder %s13, 0
    %p185 = por %p183, %p184
    %p186 = scmp.ne.s32.totalorder %s175, %s178
    %p187 = scmp.eq.s32.totalorder %s18, 1
    %p188 = por %p186, %p187
    %p189 = scmp.ne.s32.totalorder %s178, %s179
    %p190 = scmp.eq.s32.totalorder %s18, 0
    %p191 = por %p189, %p190
    %p192 = scmp.ne.s32.totalorder %s178, %s179
    %p193 = scmp.eq.s32.totalorder %s19, 1
    %p194 = por %p192, %p193
    %p196 = scmp.ne.s32.totalorder %s179, %s195
    %p197 = scmp.eq.s32.totalorder %s19, 0
    %p198 = por %p196, %p197
    %p199 = scmp.le.s32.totalorder 1, %s13
    %p200 = scmp.lt.s32.totalorder %s13, 3
    %p201 = pnand %p199, %p200
    %p202 = pneg %p201
    // Predicated region
    $region9: #{tpu_custom_call.1} parent=5 // pred_check
      _
    $region10: #{tpu_custom_call.1} parent=5 // pred_check_branch
      %204 = sbr.rel (%p201) target = $region12
    $region11: #{tpu_custom_call.1} parent=5 // pred_region
      %s205 = ssub.s32 %s13, 1
      // Predicated region
      $region13: #{tpu_custom_call.1} parent=11 // pred_check
        %p206 = pneg %p60
      $region14: #{tpu_custom_call.1} parent=11 // pred_check_branch
        %208 = sbr.rel (%p206) target = $region16
      $region15: #{tpu_custom_call.1} parent=11 // pred_region
        _
      $region16: #{tpu_custom_call.1} parent=11 // pred_fallthru
        _
      // Predicated region
      $region17: #{tpu_custom_call.1} parent=11 // pred_check
        %p209 = pneg %p81
      $region18: #{tpu_custom_call.1} parent=11 // pred_check_branch
        %211 = sbr.rel (%p209) target = $region20
      $region19: #{tpu_custom_call.1} parent=11 // pred_region
        _
      $region20: #{tpu_custom_call.1} parent=11 // pred_fallthru
        _
      // Predicated region
      $region21: #{tpu_custom_call.1} parent=11 // pred_check
        %p212 = pneg %p102
      $region22: #{tpu_custom_call.1} parent=11 // pred_check_branch
        %214 = sbr.rel (%p212) target = $region24
      $region23: #{tpu_custom_call.1} parent=11 // pred_region
        _
      $region24: #{tpu_custom_call.1} parent=11 // pred_fallthru
        _
      // Predicated region
      $region25: #{tpu_custom_call.1} parent=11 // pred_check
        %p215 = pneg %p123
      $region26: #{tpu_custom_call.1} parent=11 // pred_check_branch
        %217 = sbr.rel (%p215) target = $region28
      $region27: #{tpu_custom_call.1} parent=11 // pred_region
        _
      $region28: #{tpu_custom_call.1} parent=11 // pred_fallthru
        _
      // Predicated region
      $region29: #{tpu_custom_call.1} parent=11 // pred_check
        %p218 = pneg %p144
      $region30: #{tpu_custom_call.1} parent=11 // pred_check_branch
        %220 = sbr.rel (%p218) target = $region32
      $region31: #{tpu_custom_call.1} parent=11 // pred_region
        _
      $region32: #{tpu_custom_call.1} parent=11 // pred_fallthru
        _
      // Predicated region
      $region33: #{tpu_custom_call.1} parent=11 // pred_check
        %p221 = pneg %p165
      $region34: #{tpu_custom_call.1} parent=11 // pred_check_branch
        %223 = sbr.rel (%p221) target = $region36
      $region35: #{tpu_custom_call.1} parent=11 // pred_region
        _
      $region36: #{tpu_custom_call.1} parent=11 // pred_fallthru
        _
    $region12: #{tpu_custom_call.1} parent=5 // pred_fallthru
      _
    %p224 = scmp.lt.s32.totalorder %s13, 2
    // Predicated region
    $region37: #{tpu_custom_call.1} parent=5 // pred_check
      %p225 = pneg %p224
    $region38: #{tpu_custom_call.1} parent=5 // pred_check_branch
      %227 = sbr.rel (%p225) target = $region40
    $region39: #{tpu_custom_call.1} parent=5 // pred_region
      // Predicated region
      $region41: #{tpu_custom_call.1} parent=39 // pred_check
        %p228 = pneg %p33
      $region42: #{tpu_custom_call.1} parent=39 // pred_check_branch
        %230 = sbr.rel (%p228) target = $region44
      $region43: #{tpu_custom_call.1} parent=39 // pred_region
        %p231 = scmp.lt.s32.totalorder %s13, 1
        %s232 = scalar_select %p231, %s13, 1
        %s233 = smul.addr %s232, 32
        %s234 = smul.addr %s233, 4
        %s235 = scalar_lea.vmem %s0, %s234
      $region44: #{tpu_custom_call.1} parent=39 // pred_fallthru
        _
    $region40: #{tpu_custom_call.1} parent=5 // pred_fallthru
      _
    %p236 = scmp.le.s32.totalorder 1, %s13
    %p237 = scmp.lt.s32.totalorder %s13, 3
    %p238 = pnand %p236, %p237
    %p239 = pneg %p238
    // Predicated region
    $region45: #{tpu_custom_call.1} parent=5 // pred_check
      _
    $region46: #{tpu_custom_call.1} parent=5 // pred_check_branch
      %241 = sbr.rel (%p238) target = $region48
    $region47: #{tpu_custom_call.1} parent=5 // pred_region
      %s242 = ssub.s32 %s13, 1
      %p243 = scmp.lt.s32.totalorder %s18, 1
      %s244 = scalar_select %p243, %s18, 1
      %s245 = smul.addr %s244, 32
      %s246 = smul.addr %s245, 4
      %s247 = scalar_lea.vmem %s0, %s246
      %p248 = pneg %p39
      %p249 = pneg %p36
      %p250 = pneg %p60
      %p251 = pneg %p57
      %p252 = pneg %p81
      %p253 = pneg %p78
      %p254 = pneg %p102
      %p255 = pneg %p99
      %p256 = pneg %p123
      %p257 = pneg %p120
      %p258 = pneg %p144
      %p259 = pneg %p141
      %p260 = pneg %p165
      %p261 = pneg %p162
      %p262 = pneg %p191
      %p263 = pneg %p188
      %p264 = scmp.lt.s32.totalorder %s18, 1
      %s265 = scalar_select %p264, %s18, 1
      %s266 = smul.addr %s265, 32
      %s267 = smul.addr %s266, 8
      %s268 = scalar_lea.vmem %s7, %s267
      %p269 = scmp.lt.s32.totalorder %s18, 1
      %s270 = scalar_select %p269, %s18, 1
      %s271 = smul.addr %s270, 32
      %s272 = smul.addr %s271, 4
      %s273 = scalar_lea.vmem %s0, %s272
      %p274 = scmp.lt.s32.totalorder %s18, 1
      %s275 = scalar_select %p274, %s18, 1
      %s276 = smul.addr %s275, 32
      %s277 = smul.addr %s276, 8
      %s278 = scalar_lea.vmem %s7, %s277
      %v280 = vld [vmem:[%s273] sm:$0xf]
      %v281 = vld [vmem:[%s273 + $0x4] sm:$0xf]
      %v282 = vld [vmem:[%s273 + $0x8] sm:$0xf]
      %v283 = vld [vmem:[%s273 + $0xc] sm:$0xf]
      %v284 = vld [vmem:[%s273 + $0x10] sm:$0xf]
      %v285 = vld [vmem:[%s273 + $0x14] sm:$0xf]
      %v286 = vld [vmem:[%s273 + $0x18] sm:$0xf]
      %v287 = vld [vmem:[%s273 + $0x1c] sm:$0xf]
      %v288 = vld [vmem:[%s273 + $0x20] sm:$0xf]
      %v289 = vld [vmem:[%s273 + $0x24] sm:$0xf]
      %v290 = vld [vmem:[%s273 + $0x28] sm:$0xf]
      %v291 = vld [vmem:[%s273 + $0x2c] sm:$0xf]
      %v292 = vld [vmem:[%s273 + $0x30] sm:$0xf]
      %v293 = vld [vmem:[%s273 + $0x34] sm:$0xf]
      %v294 = vld [vmem:[%s273 + $0x38] sm:$0xf]
      %v295 = vld [vmem:[%s273 + $0x3c] sm:$0xf]
      %v296 = vld [vmem:[%s273 + $0x40] sm:$0xf]
      %v297 = vld [vmem:[%s273 + $0x44] sm:$0xf]
      %v298 = vld [vmem:[%s273 + $0x48] sm:$0xf]
      %v299 = vld [vmem:[%s273 + $0x4c] sm:$0xf]
      %v300 = vld [vmem:[%s273 + $0x50] sm:$0xf]
      %v301 = vld [vmem:[%s273 + $0x54] sm:$0xf]
      %v302 = vld [vmem:[%s273 + $0x58] sm:$0xf]
      %v303 = vld [vmem:[%s273 + $0x5c] sm:$0xf]
      %v304 = vld [vmem:[%s273 + $0x60] sm:$0xf]
      %v305 = vld [vmem:[%s273 + $0x64] sm:$0xf]
      %v306 = vld [vmem:[%s273 + $0x68] sm:$0xf]
      %v307 = vld [vmem:[%s273 + $0x6c] sm:$0xf]
      %v308 = vld [vmem:[%s273 + $0x70] sm:$0xf]
      %v309 = vld [vmem:[%s273 + $0x74] sm:$0xf]
      %v310 = vld [vmem:[%s273 + $0x78] sm:$0xf]
      %v311 = vld [vmem:[%s273 + $0x7c] sm:$0xf]
      %v312 = vunpack.c.l.bf16 %v280
      %v313 = vunpack.c.l.bf16 %v281
      %v314 = vunpack.c.l.bf16 %v282
      %v315 = vunpack.c.l.bf16 %v283
      %v316 = vunpack.c.l.bf16 %v284
      %v317 = vunpack.c.l.bf16 %v285
      %v318 = vunpack.c.l.bf16 %v286
      %v319 = vunpack.c.l.bf16 %v287
      %v320 = vunpack.c.l.bf16 %v288
      %v321 = vunpack.c.l.bf16 %v289
      %v322 = vunpack.c.l.bf16 %v290
      %v323 = vunpack.c.l.bf16 %v291
      %v324 = vunpack.c.l.bf16 %v292
      %v325 = vunpack.c.l.bf16 %v293
      %v326 = vunpack.c.l.bf16 %v294
      %v327 = vunpack.c.l.bf16 %v295
      %v328 = vunpack.c.l.bf16 %v296
      %v329 = vunpack.c.l.bf16 %v297
      %v330 = vunpack.c.l.bf16 %v298
      %v331 = vunpack.c.l.bf16 %v299
      %v332 = vunpack.c.l.bf16 %v300
      %v333 = vunpack.c.l.bf16 %v301
      %v334 = vunpack.c.l.bf16 %v302
      %v335 = vunpack.c.l.bf16 %v303
      %v336 = vunpack.c.l.bf16 %v304
      %v337 = vunpack.c.l.bf16 %v305
      %v338 = vunpack.c.l.bf16 %v306
      %v339 = vunpack.c.l.bf16 %v307
      %v340 = vunpack.c.l.bf16 %v308
      %v341 = vunpack.c.l.bf16 %v309
      %v342 = vunpack.c.l.bf16 %v310
      %v343 = vunpack.c.l.bf16 %v311
      %v344 = vld [vmem:[%s1] sm:$0xf]
      %v345 = vld [vmem:[%s1 + $0x4] sm:$0xf]
      %v346 = vld [vmem:[%s2] sm:$0x1]
      %v348 = vperm.slane %v346, 0
      %v382 = vunpack.c.l.b16 %v280
      %v383 = vunpack.c.l.b16 %v281
      %v384 = vunpack.c.l.b16 %v282
      %v385 = vunpack.c.l.b16 %v283
      %v386 = vunpack.c.l.b16 %v284
      %v387 = vunpack.c.l.b16 %v285
      %v388 = vunpack.c.l.b16 %v286
      %v389 = vunpack.c.l.b16 %v287
      %v390 = vunpack.c.l.b16 %v288
      %v391 = vunpack.c.l.b16 %v289
      %v392 = vunpack.c.l.b16 %v290
      %v393 = vunpack.c.l.b16 %v291
      %v394 = vunpack.c.l.b16 %v292
      %v395 = vunpack.c.l.b16 %v293
      %v396 = vunpack.c.l.b16 %v294
      %v397 = vunpack.c.l.b16 %v295
      %v398 = vunpack.c.l.b16 %v296
      %v399 = vunpack.c.l.b16 %v297
      %v400 = vunpack.c.l.b16 %v298
      %v401 = vunpack.c.l.b16 %v299
      %v402 = vunpack.c.l.b16 %v300
      %v403 = vunpack.c.l.b16 %v301
      %v404 = vunpack.c.l.b16 %v302
      %v405 = vunpack.c.l.b16 %v303
      %v406 = vunpack.c.l.b16 %v304
      %v407 = vunpack.c.l.b16 %v305
      %v408 = vunpack.c.l.b16 %v306
      %v409 = vunpack.c.l.b16 %v307
      %v410 = vunpack.c.l.b16 %v308
      %v411 = vunpack.c.l.b16 %v309
      %v412 = vunpack.c.l.b16 %v310
      %v413 = vunpack.c.l.b16 %v311
      %v414 = vpack.c.b16 %v383, %v382
      %v415 = vpack.c.b16 %v385, %v384
      %v416 = vpack.c.b16 %v387, %v386
      %v417 = vpack.c.b16 %v389, %v388
      %v418 = vpack.c.b16 %v391, %v390
      %v419 = vpack.c.b16 %v393, %v392
      %v420 = vpack.c.b16 %v395, %v394
      %v421 = vpack.c.b16 %v397, %v396
      %v422 = vpack.c.b16 %v399, %v398
      %v423 = vpack.c.b16 %v401, %v400
      %v424 = vpack.c.b16 %v403, %v402
      %v425 = vpack.c.b16 %v405, %v404
      %v426 = vpack.c.b16 %v407, %v406
      %v427 = vpack.c.b16 %v409, %v408
      %v428 = vpack.c.b16 %v411, %v410
      %v429 = vpack.c.b16 %v413, %v412
      %v432 = vunpack.c.l.b16 %v344
      %v433 = vunpack.c.l.b16 %v345
      %v434 = vpack.c.b16 %v433, %v432
      %vm436 = vcmask 130048
      %v438 = vsel %vm436, %v414, 0
      %v441 = vsel %vm436, %v415, 0
      %v444 = vsel %vm436, %v416, 0
      %v447 = vsel %vm436, %v417, 0
      %v450 = vsel %vm436, %v418, 0
      %v453 = vsel %vm436, %v419, 0
      %v456 = vsel %vm436, %v420, 0
      %v459 = vsel %vm436, %v421, 0
      %v462 = vsel %vm436, %v422, 0
      %v465 = vsel %vm436, %v423, 0
      %v468 = vsel %vm436, %v424, 0
      %v471 = vsel %vm436, %v425, 0
      %v474 = vsel %vm436, %v426, 0
      %v477 = vsel %vm436, %v427, 0
      %v480 = vsel %vm436, %v428, 0
      %v483 = vsel %vm436, %v429, 0
      %485 = vmatpush.bf16.msra.mxu0 0
      %486 = vmatpush.bf16.msra.mxu0 0
      %487 = vmatpush.bf16.msra.mxu0 0
      %488 = vmatpush.bf16.msra.mxu0 0
      %489 = vmatpush.bf16.msra.mxu0 0
      %490 = vmatpush.bf16.msra.mxu0 0
      %491 = vmatpush.bf16.msra.mxu0 0
      %492 = vmatpush.bf16.msra.mxu0 %v434
      %493 = vmatmul.bf16.gmra.mxu0 %v438
      %v494 = vpop.f32.mrf.mxu0
      %v495 = vadd.f32 %v348, %v494
      %v496 = vpop.f32.mrf.mxu0
      %v497 = vadd.f32 %v348, %v496
      %498 = vmatmul.bf16.gmra.mxu0 %v441
      %v499 = vpop.f32.mrf.mxu0
      %v500 = vadd.f32 %v348, %v499
      %v501 = vpop.f32.mrf.mxu0
      %v502 = vadd.f32 %v348, %v501
      %503 = vmatmul.bf16.gmra.mxu0 %v444
      %v504 = vpop.f32.mrf.mxu0
      %v505 = vadd.f32 %v348, %v504
      %v506 = vpop.f32.mrf.mxu0
      %v507 = vadd.f32 %v348, %v506
      %508 = vmatmul.bf16.gmra.mxu0 %v447
      %v509 = vpop.f32.mrf.mxu0
      %v510 = vadd.f32 %v348, %v509
      %v511 = vpop.f32.mrf.mxu0
      %v512 = vadd.f32 %v348, %v511
      %513 = vmatmul.bf16.gmra.mxu0 %v450
      %v514 = vpop.f32.mrf.mxu0
      %v515 = vadd.f32 %v348, %v514
      %v516 = vpop.f32.mrf.mxu0
      %v517 = vadd.f32 %v348, %v516
      %518 = vmatmul.bf16.gmra.mxu0 %v453
      %v519 = vpop.f32.mrf.mxu0
      %v520 = vadd.f32 %v348, %v519
      %v521 = vpop.f32.mrf.mxu0
      %v522 = vadd.f32 %v348, %v521
      %523 = vmatmul.bf16.gmra.mxu0 %v456
      %v524 = vpop.f32.mrf.mxu0
      %v525 = vadd.f32 %v348, %v524
      %v526 = vpop.f32.mrf.mxu0
      %v527 = vadd.f32 %v348, %v526
      %528 = vmatmul.bf16.gmra.mxu0 %v459
      %v529 = vpop.f32.mrf.mxu0
      %v530 = vadd.f32 %v348, %v529
      %v531 = vpop.f32.mrf.mxu0
      %v532 = vadd.f32 %v348, %v531
      %533 = vmatmul.bf16.gmra.mxu0 %v462
      %v534 = vpop.f32.mrf.mxu0
      %v535 = vadd.f32 %v348, %v534
      %v536 = vpop.f32.mrf.mxu0
      %v537 = vadd.f32 %v348, %v536
      %538 = vmatmul.bf16.gmra.mxu0 %v465
      %v539 = vpop.f32.mrf.mxu0
      %v540 = vadd.f32 %v348, %v539
      %v541 = vpop.f32.mrf.mxu0
      %v542 = vadd.f32 %v348, %v541
      %543 = vmatmul.bf16.gmra.mxu0 %v468
      %v544 = vpop.f32.mrf.mxu0
      %v545 = vadd.f32 %v348, %v544
      %v546 = vpop.f32.mrf.mxu0
      %v547 = vadd.f32 %v348, %v546
      %548 = vmatmul.bf16.gmra.mxu0 %v471
      %v549 = vpop.f32.mrf.mxu0
      %v550 = vadd.f32 %v348, %v549
      %v551 = vpop.f32.mrf.mxu0
      %v552 = vadd.f32 %v348, %v551
      %553 = vmatmul.bf16.gmra.mxu0 %v474
      %v554 = vpop.f32.mrf.mxu0
      %v555 = vadd.f32 %v348, %v554
      %v556 = vpop.f32.mrf.mxu0
      %v557 = vadd.f32 %v348, %v556
      %558 = vmatmul.bf16.gmra.mxu0 %v477
      %v559 = vpop.f32.mrf.mxu0
      %v560 = vadd.f32 %v348, %v559
      %v561 = vpop.f32.mrf.mxu0
      %v562 = vadd.f32 %v348, %v561
      %563 = vmatmul.bf16.gmra.mxu0 %v480
      %v564 = vpop.f32.mrf.mxu0
      %v565 = vadd.f32 %v348, %v564
      %v566 = vpop.f32.mrf.mxu0
      %v567 = vadd.f32 %v348, %v566
      %568 = vmatmul.bf16.gmra.mxu0 %v483
      %v569 = vpop.f32.mrf.mxu0
      %v570 = vadd.f32 %v348, %v569
      %v571 = vpop.f32.mrf.mxu0
      %v572 = vadd.f32 %v348, %v571
      %573 = vdwg.mxu0
      %v574 = vmax.f32 %v495, 0.0
      %v575 = vmax.f32 %v497, 0.0
      %v576 = vmax.f32 %v500, 0.0
      %v577 = vmax.f32 %v502, 0.0
      %v578 = vmax.f32 %v505, 0.0
      %v579 = vmax.f32 %v507, 0.0
      %v580 = vmax.f32 %v510, 0.0
      %v581 = vmax.f32 %v512, 0.0
      %v582 = vmax.f32 %v515, 0.0
      %v583 = vmax.f32 %v517, 0.0
      %v584 = vmax.f32 %v520, 0.0
      %v585 = vmax.f32 %v522, 0.0
      %v586 = vmax.f32 %v525, 0.0
      %v587 = vmax.f32 %v527, 0.0
      %v588 = vmax.f32 %v530, 0.0
      %v589 = vmax.f32 %v532, 0.0
      %v590 = vmax.f32 %v535, 0.0
      %v591 = vmax.f32 %v537, 0.0
      %v592 = vmax.f32 %v540, 0.0
      %v593 = vmax.f32 %v542, 0.0
      %v594 = vmax.f32 %v545, 0.0
      %v595 = vmax.f32 %v547, 0.0
      %v596 = vmax.f32 %v550, 0.0
      %v597 = vmax.f32 %v552, 0.0
      %v598 = vmax.f32 %v555, 0.0
      %v599 = vmax.f32 %v557, 0.0
      %v600 = vmax.f32 %v560, 0.0
      %v601 = vmax.f32 %v562, 0.0
      %v602 = vmax.f32 %v565, 0.0
      %v603 = vmax.f32 %v567, 0.0
      %v604 = vmax.f32 %v570, 0.0
      %v605 = vmax.f32 %v572, 0.0
      %v606 = vlaneseq
      %v607 = vshrl.u32 %v606, 7
      %v608 = vadd.s32 %v607, 8
      %v609 = vadd.s32 %v607, 16
      %v610 = vadd.s32 %v607, 24
      %v611 = vadd.s32 %v607, 32
      %v612 = vadd.s32 %v607, 40
      %v613 = vadd.s32 %v607, 48
      %v614 = vadd.s32 %v607, 56
      %v615 = vadd.s32 %v607, 64
      %v616 = vadd.s32 %v607, 72
      %v617 = vadd.s32 %v607, 80
      %v618 = vadd.s32 %v607, 88
      %v619 = vadd.s32 %v607, 96
      %v620 = vadd.s32 %v607, 104
      %v621 = vadd.s32 %v607, 112
      %v622 = vadd.s32 %v607, 120
      %v623 = vadd.s32 %v607, 128
      %v624 = vadd.s32 %v607, 136
      %v625 = vadd.s32 %v607, 144
      %v626 = vadd.s32 %v607, 152
      %v627 = vadd.s32 %v607, 160
      %v628 = vadd.s32 %v607, 168
      %v629 = vadd.s32 %v607, 176
      %v630 = vadd.s32 %v607, 184
      %v631 = vadd.s32 %v607, 192
      %v632 = vadd.s32 %v607, 200
      %v633 = vadd.s32 %v607, 208
      %v634 = vadd.s32 %v607, 216
      %v635 = vadd.s32 %v607, 224
      %v636 = vadd.s32 %v607, 232
      %v637 = vadd.s32 %v607, 240
      %v638 = vadd.s32 %v607, 248
      %vm639 = vcmp.lt.s32.totalorder %v607, 0
      %v640 = vsub.s32 0, %v607
      %v641 = vsel %vm639, %v640, %v607
      %v642 = vshrl.u32 %v641, 4
      %v643 = vand.u32 %v641, 15
      %v644 = vsub.s32 0, %v643
      %v645 = vsel %vm639, %v644, %v643
      %vm646 = vcmp.lt.s32.totalorder %v608, 0
      %v647 = vsub.s32 0, %v608
      %v648 = vsel %vm646, %v647, %v608
      %v649 = vshrl.u32 %v648, 4
      %v650 = vand.u32 %v648, 15
      %v651 = vsub.s32 0, %v650
      %v652 = vsel %vm646, %v651, %v650
      %vm653 = vcmp.lt.s32.totalorder %v609, 0
      %v654 = vsub.s32 0, %v609
      %v655 = vsel %vm653, %v654, %v609
      %v656 = vshrl.u32 %v655, 4
      %v657 = vand.u32 %v655, 15
      %v658 = vsub.s32 0, %v657
      %v659 = vsel %vm653, %v658, %v657
      %vm660 = vcmp.lt.s32.totalorder %v610, 0
      %v661 = vsub.s32 0, %v610
      %v662 = vsel %vm660, %v661, %v610
      %v663 = vshrl.u32 %v662, 4
      %v664 = vand.u32 %v662, 15
      %v665 = vsub.s32 0, %v664
      %v666 = vsel %vm660, %v665, %v664
      %vm667 = vcmp.lt.s32.totalorder %v611, 0
      %v668 = vsub.s32 0, %v611
      %v669 = vsel %vm667, %v668, %v611
      %v670 = vshrl.u32 %v669, 4
      %v671 = vand.u32 %v669, 15
      %v672 = vsub.s32 0, %v671
      %v673 = vsel %vm667, %v672, %v671
      %vm674 = vcmp.lt.s32.totalorder %v612, 0
      %v675 = vsub.s32 0, %v612
      %v676 = vsel %vm674, %v675, %v612
      %v677 = vshrl.u32 %v676, 4
      %v678 = vand.u32 %v676, 15
      %v679 = vsub.s32 0, %v678
      %v680 = vsel %vm674, %v679, %v678
      %vm681 = vcmp.lt.s32.totalorder %v613, 0
      %v682 = vsub.s32 0, %v613
      %v683 = vsel %vm681, %v682, %v613
      %v684 = vshrl.u32 %v683, 4
      %v685 = vand.u32 %v683, 15
      %v686 = vsub.s32 0, %v685
      %v687 = vsel %vm681, %v686, %v685
      %vm688 = vcmp.lt.s32.totalorder %v614, 0
      %v689 = vsub.s32 0, %v614
      %v690 = vsel %vm688, %v689, %v614
      %v691 = vshrl.u32 %v690, 4
      %v692 = vand.u32 %v690, 15
      %v693 = vsub.s32 0, %v692
      %v694 = vsel %vm688, %v693, %v692
      %vm695 = vcmp.lt.s32.totalorder %v615, 0
      %v696 = vsub.s32 0, %v615
      %v697 = vsel %vm695, %v696, %v615
      %v698 = vshrl.u32 %v697, 4
      %v699 = vand.u32 %v697, 15
      %v700 = vsub.s32 0, %v699
      %v701 = vsel %vm695, %v700, %v699
      %vm702 = vcmp.lt.s32.totalorder %v616, 0
      %v703 = vsub.s32 0, %v616
      %v704 = vsel %vm702, %v703, %v616
      %v705 = vshrl.u32 %v704, 4
      %v706 = vand.u32 %v704, 15
      %v707 = vsub.s32 0, %v706
      %v708 = vsel %vm702, %v707, %v706
      %vm709 = vcmp.lt.s32.totalorder %v617, 0
      %v710 = vsub.s32 0, %v617
      %v711 = vsel %vm709, %v710, %v617
      %v712 = vshrl.u32 %v711, 4
      %v713 = vand.u32 %v711, 15
      %v714 = vsub.s32 0, %v713
      %v715 = vsel %vm709, %v714, %v713
      %vm716 = vcmp.lt.s32.totalorder %v618, 0
      %v717 = vsub.s32 0, %v618
      %v718 = vsel %vm716, %v717, %v618
      %v719 = vshrl.u32 %v718, 4
      %v720 = vand.u32 %v718, 15
      %v721 = vsub.s32 0, %v720
      %v722 = vsel %vm716, %v721, %v720
      %vm723 = vcmp.lt.s32.totalorder %v619, 0
      %v724 = vsub.s32 0, %v619
      %v725 = vsel %vm723, %v724, %v619
      %v726 = vshrl.u32 %v725, 4
      %v727 = vand.u32 %v725, 15
      %v728 = vsub.s32 0, %v727
      %v729 = vsel %vm723, %v728, %v727
      %vm730 = vcmp.lt.s32.totalorder %v620, 0
      %v731 = vsub.s32 0, %v620
      %v732 = vsel %vm730, %v731, %v620
      %v733 = vshrl.u32 %v732, 4
      %v734 = vand.u32 %v732, 15
      %v735 = vsub.s32 0, %v734
      %v736 = vsel %vm730, %v735, %v734
      %vm737 = vcmp.lt.s32.totalorder %v621, 0
      %v738 = vsub.s32 0, %v621
      %v739 = vsel %vm737, %v738, %v621
      %v740 = vshrl.u32 %v739, 4
      %v741 = vand.u32 %v739, 15
      %v742 = vsub.s32 0, %v741
      %v743 = vsel %vm737, %v742, %v741
      %vm744 = vcmp.lt.s32.totalorder %v622, 0
      %v745 = vsub.s32 0, %v622
      %v746 = vsel %vm744, %v745, %v622
      %v747 = vshrl.u32 %v746, 4
      %v748 = vand.u32 %v746, 15
      %v749 = vsub.s32 0, %v748
      %v750 = vsel %vm744, %v749, %v748
      %vm751 = vcmp.lt.s32.totalorder %v623, 0
      %v752 = vsub.s32 0, %v623
      %v753 = vsel %vm751, %v752, %v623
      %v754 = vshrl.u32 %v753, 4
      %v755 = vand.u32 %v753, 15
      %v756 = vsub.s32 0, %v755
      %v757 = vsel %vm751, %v756, %v755
      %vm758 = vcmp.lt.s32.totalorder %v624, 0
      %v759 = vsub.s32 0, %v624
      %v760 = vsel %vm758, %v759, %v624
      %v761 = vshrl.u32 %v760, 4
      %v762 = vand.u32 %v760, 15
      %v763 = vsub.s32 0, %v762
      %v764 = vsel %vm758, %v763, %v762
      %vm765 = vcmp.lt.s32.totalorder %v625, 0
      %v766 = vsub.s32 0, %v625
      %v767 = vsel %vm765, %v766, %v625
      %v768 = vshrl.u32 %v767, 4
      %v769 = vand.u32 %v767, 15
      %v770 = vsub.s32 0, %v769
      %v771 = vsel %vm765, %v770, %v769
      %vm772 = vcmp.lt.s32.totalorder %v626, 0
      %v773 = vsub.s32 0, %v626
      %v774 = vsel %vm772, %v773, %v626
      %v775 = vshrl.u32 %v774, 4
      %v776 = vand.u32 %v774, 15
      %v777 = vsub.s32 0, %v776
      %v778 = vsel %vm772, %v777, %v776
      %vm779 = vcmp.lt.s32.totalorder %v627, 0
      %v780 = vsub.s32 0, %v627
      %v781 = vsel %vm779, %v780, %v627
      %v782 = vshrl.u32 %v781, 4
      %v783 = vand.u32 %v781, 15
      %v784 = vsub.s32 0, %v783
      %v785 = vsel %vm779, %v784, %v783
      %vm786 = vcmp.lt.s32.totalorder %v628, 0
      %v787 = vsub.s32 0, %v628
      %v788 = vsel %vm786, %v787, %v628
      %v789 = vshrl.u32 %v788, 4
      %v790 = vand.u32 %v788, 15
      %v791 = vsub.s32 0, %v790
      %v792 = vsel %vm786, %v791, %v790
      %vm793 = vcmp.lt.s32.totalorder %v629, 0
      %v794 = vsub.s32 0, %v629
      %v795 = vsel %vm793, %v794, %v629
      %v796 = vshrl.u32 %v795, 4
      %v797 = vand.u32 %v795, 15
      %v798 = vsub.s32 0, %v797
      %v799 = vsel %vm793, %v798, %v797
      %vm800 = vcmp.lt.s32.totalorder %v630, 0
      %v801 = vsub.s32 0, %v630
      %v802 = vsel %vm800, %v801, %v630
      %v803 = vshrl.u32 %v802, 4
      %v804 = vand.u32 %v802, 15
      %v805 = vsub.s32 0, %v804
      %v806 = vsel %vm800, %v805, %v804
      %vm807 = vcmp.lt.s32.totalorder %v631, 0
      %v808 = vsub.s32 0, %v631
      %v809 = vsel %vm807, %v808, %v631
      %v810 = vshrl.u32 %v809, 4
      %v811 = vand.u32 %v809, 15
      %v812 = vsub.s32 0, %v811
      %v813 = vsel %vm807, %v812, %v811
      %vm814 = vcmp.lt.s32.totalorder %v632, 0
      %v815 = vsub.s32 0, %v632
      %v816 = vsel %vm814, %v815, %v632
      %v817 = vshrl.u32 %v816, 4
      %v818 = vand.u32 %v816, 15
      %v819 = vsub.s32 0, %v818
      %v820 = vsel %vm814, %v819, %v818
      %vm821 = vcmp.lt.s32.totalorder %v633, 0
      %v822 = vsub.s32 0, %v633
      %v823 = vsel %vm821, %v822, %v633
      %v824 = vshrl.u32 %v823, 4
      %v825 = vand.u32 %v823, 15
      %v826 = vsub.s32 0, %v825
      %v827 = vsel %vm821, %v826, %v825
      %vm828 = vcmp.lt.s32.totalorder %v634, 0
      %v829 = vsub.s32 0, %v634
      %v830 = vsel %vm828, %v829, %v634
      %v831 = vshrl.u32 %v830, 4
      %v832 = vand.u32 %v830, 15
      %v833 = vsub.s32 0, %v832
      %v834 = vsel %vm828, %v833, %v832
      %vm835 = vcmp.lt.s32.totalorder %v635, 0
      %v836 = vsub.s32 0, %v635
      %v837 = vsel %vm835, %v836, %v635
      %v838 = vshrl.u32 %v837, 4
      %v839 = vand.u32 %v837, 15
      %v840 = vsub.s32 0, %v839
      %v841 = vsel %vm835, %v840, %v839
      %vm842 = vcmp.lt.s32.totalorder %v636, 0
      %v843 = vsub.s32 0, %v636
      %v844 = vsel %vm842, %v843, %v636
      %v845 = vshrl.u32 %v844, 4
      %v846 = vand.u32 %v844, 15
      %v847 = vsub.s32 0, %v846
      %v848 = vsel %vm842, %v847, %v846
      %vm849 = vcmp.lt.s32.totalorder %v637, 0
      %v850 = vsub.s32 0, %v637
      %v851 = vsel %vm849, %v850, %v637
      %v852 = vshrl.u32 %v851, 4
      %v853 = vand.u32 %v851, 15
      %v854 = vsub.s32 0, %v853
      %v855 = vsel %vm849, %v854, %v853
      %vm856 = vcmp.lt.s32.totalorder %v638, 0
      %v857 = vsub.s32 0, %v638
      %v858 = vsel %vm856, %v857, %v638
      %v859 = vshrl.u32 %v858, 4
      %v860 = vand.u32 %v858, 15
      %v861 = vsub.s32 0, %v860
      %v862 = vsel %vm856, %v861, %v860
      %vm863 = vcmp.ne.s32.totalorder %v645, 0
      %vm864 = vcmp.ne.s32.totalorder %v652, 0
      %vm865 = vcmp.ne.s32.totalorder %v659, 0
      %vm866 = vcmp.ne.s32.totalorder %v666, 0
      %vm867 = vcmp.ne.s32.totalorder %v673, 0
      %vm868 = vcmp.ne.s32.totalorder %v680, 0
      %vm869 = vcmp.ne.s32.totalorder %v687, 0
      %vm870 = vcmp.ne.s32.totalorder %v694, 0
      %vm871 = vcmp.ne.s32.totalorder %v701, 0
      %vm872 = vcmp.ne.s32.totalorder %v708, 0
      %vm873 = vcmp.ne.s32.totalorder %v715, 0
      %vm874 = vcmp.ne.s32.totalorder %v722, 0
      %vm875 = vcmp.ne.s32.totalorder %v729, 0
      %vm876 = vcmp.ne.s32.totalorder %v736, 0
      %vm877 = vcmp.ne.s32.totalorder %v743, 0
      %vm878 = vcmp.ne.s32.totalorder %v750, 0
      %vm879 = vcmp.ne.s32.totalorder %v757, 0
      %vm880 = vcmp.ne.s32.totalorder %v764, 0
      %vm881 = vcmp.ne.s32.totalorder %v771, 0
      %vm882 = vcmp.ne.s32.totalorder %v778, 0
      %vm883 = vcmp.ne.s32.totalorder %v785, 0
      %vm884 = vcmp.ne.s32.totalorder %v792, 0
      %vm885 = vcmp.ne.s32.totalorder %v799, 0
      %vm886 = vcmp.ne.s32.totalorder %v806, 0
      %vm887 = vcmp.ne.s32.totalorder %v813, 0
      %vm888 = vcmp.ne.s32.totalorder %v820, 0
      %vm889 = vcmp.ne.s32.totalorder %v827, 0
      %vm890 = vcmp.ne.s32.totalorder %v834, 0
      %vm891 = vcmp.ne.s32.totalorder %v841, 0
      %vm892 = vcmp.ne.s32.totalorder %v848, 0
      %vm893 = vcmp.ne.s32.totalorder %v855, 0
      %vm894 = vcmp.ne.s32.totalorder %v862, 0
      %vm895 = vcmp.lt.s32.totalorder %v645, 0
      %vm896 = vcmp.lt.s32.totalorder %v652, 0
      %vm897 = vcmp.lt.s32.totalorder %v659, 0
      %vm898 = vcmp.lt.s32.totalorder %v666, 0
      %vm899 = vcmp.lt.s32.totalorder %v673, 0
      %vm900 = vcmp.lt.s32.totalorder %v680, 0
      %vm901 = vcmp.lt.s32.totalorder %v687, 0
      %vm902 = vcmp.lt.s32.totalorder %v694, 0
      %vm903 = vcmp.lt.s32.totalorder %v701, 0
      %vm904 = vcmp.lt.s32.totalorder %v708, 0
      %vm905 = vcmp.lt.s32.totalorder %v715, 0
      %vm906 = vcmp.lt.s32.totalorder %v722, 0
      %vm907 = vcmp.lt.s32.totalorder %v729, 0
      %vm908 = vcmp.lt.s32.totalorder %v736, 0
      %vm909 = vcmp.lt.s32.totalorder %v743, 0
      %vm910 = vcmp.lt.s32.totalorder %v750, 0
      %vm911 = vcmp.lt.s32.totalorder %v757, 0
      %vm912 = vcmp.lt.s32.totalorder %v764, 0
      %vm913 = vcmp.lt.s32.totalorder %v771, 0
      %vm914 = vcmp.lt.s32.totalorder %v778, 0
      %vm915 = vcmp.lt.s32.totalorder %v785, 0
      %vm916 = vcmp.lt.s32.totalorder %v792, 0
      %vm917 = vcmp.lt.s32.totalorder %v799, 0
      %vm918 = vcmp.lt.s32.totalorder %v806, 0
      %vm919 = vcmp.lt.s32.totalorder %v813, 0
      %vm920 = vcmp.lt.s32.totalorder %v820, 0
      %vm921 = vcmp.lt.s32.totalorder %v827, 0
      %vm922 = vcmp.lt.s32.totalorder %v834, 0
      %vm923 = vcmp.lt.s32.totalorder %v841, 0
      %vm924 = vcmp.lt.s32.totalorder %v848, 0
      %vm925 = vcmp.lt.s32.totalorder %v855, 0
      %vm926 = vcmp.lt.s32.totalorder %v862, 0
      %vm927 = vmand %vm895, %vm863
      %vm928 = vmand %vm896, %vm864
      %vm929 = vmand %vm897, %vm865
      %vm930 = vmand %vm898, %vm866
      %vm931 = vmand %vm899, %vm867
      %vm932 = vmand %vm900, %vm868
      %vm933 = vmand %vm901, %vm869
      %vm934 = vmand %vm902, %vm870
      %vm935 = vmand %vm903, %vm871
      %vm936 = vmand %vm904, %vm872
      %vm937 = vmand %vm905, %vm873
      %vm938 = vmand %vm906, %vm874
      %vm939 = vmand %vm907, %vm875
      %vm940 = vmand %vm908, %vm876
      %vm941 = vmand %vm909, %vm877
      %vm942 = vmand %vm910, %vm878
      %vm943 = vmand %vm911, %vm879
      %vm944 = vmand %vm912, %vm880
      %vm945 = vmand %vm913, %vm881
      %vm946 = vmand %vm914, %vm882
      %vm947 = vmand %vm915, %vm883
      %vm948 = vmand %vm916, %vm884
      %vm949 = vmand %vm917, %vm885
      %vm950 = vmand %vm918, %vm886
      %vm951 = vmand %vm919, %vm887
      %vm952 = vmand %vm920, %vm888
      %vm953 = vmand %vm921, %vm889
      %vm954 = vmand %vm922, %vm890
      %vm955 = vmand %vm923, %vm891
      %vm956 = vmand %vm924, %vm892
      %vm957 = vmand %vm925, %vm893
      %vm958 = vmand %vm926, %vm894
      %v959 = vadd.s32 %v645, 16
      %v960 = vadd.s32 %v652, 16
      %v961 = vadd.s32 %v659, 16
      %v962 = vadd.s32 %v666, 16
      %v963 = vadd.s32 %v673, 16
      %v964 = vadd.s32 %v680, 16
      %v965 = vadd.s32 %v687, 16
      %v966 = vadd.s32 %v694, 16
      %v967 = vadd.s32 %v701, 16
      %v968 = vadd.s32 %v708, 16
      %v969 = vadd.s32 %v715, 16
      %v970 = vadd.s32 %v722, 16
      %v971 = vadd.s32 %v729, 16
      %v972 = vadd.s32 %v736, 16
      %v973 = vadd.s32 %v743, 16
      %v974 = vadd.s32 %v750, 16
      %v975 = vadd.s32 %v757, 16
      %v976 = vadd.s32 %v764, 16
      %v977 = vadd.s32 %v771, 16
      %v978 = vadd.s32 %v778, 16
      %v979 = vadd.s32 %v785, 16
      %v980 = vadd.s32 %v792, 16
      %v981 = vadd.s32 %v799, 16
      %v982 = vadd.s32 %v806, 16
      %v983 = vadd.s32 %v813, 16
      %v984 = vadd.s32 %v820, 16
      %v985 = vadd.s32 %v827, 16
      %v986 = vadd.s32 %v834, 16
      %v987 = vadd.s32 %v841, 16
      %v988 = vadd.s32 %v848, 16
      %v989 = vadd.s32 %v855, 16
      %v990 = vadd.s32 %v862, 16
      %v991 = vsel %vm927, %v959, %v645
      %v992 = vsel %vm928, %v960, %v652
      %v993 = vsel %vm929, %v961, %v659
      %v994 = vsel %vm930, %v962, %v666
      %v995 = vsel %vm931, %v963, %v673
      %v996 = vsel %vm932, %v964, %v680
      %v997 = vsel %vm933, %v965, %v687
      %v998 = vsel %vm934, %v966, %v694
      %v999 = vsel %vm935, %v967, %v701
      %v1000 = vsel %vm936, %v968, %v708
      %v1001 = vsel %vm937, %v969, %v715
      %v1002 = vsel %vm938, %v970, %v722
      %v1003 = vsel %vm939, %v971, %v729
      %v1004 = vsel %vm940, %v972, %v736
      %v1005 = vsel %vm941, %v973, %v743
      %v1006 = vsel %vm942, %v974, %v750
      %v1007 = vsel %vm943, %v975, %v757
      %v1008 = vsel %vm944, %v976, %v764
      %v1009 = vsel %vm945, %v977, %v771
      %v1010 = vsel %vm946, %v978, %v778
      %v1011 = vsel %vm947, %v979, %v785
      %v1012 = vsel %vm948, %v980, %v792
      %v1013 = vsel %vm949, %v981, %v799
      %v1014 = vsel %vm950, %v982, %v806
      %v1015 = vsel %vm951, %v983, %v813
      %v1016 = vsel %vm952, %v984, %v820
      %v1017 = vsel %vm953, %v985, %v827
      %v1018 = vsel %vm954, %v986, %v834
      %v1019 = vsel %vm955, %v987, %v841
      %v1020 = vsel %vm956, %v988, %v848
      %v1021 = vsel %vm957, %v989, %v855
      %v1022 = vsel %vm958, %v990, %v862
      %v1023 = vrot.slane %v574, 7
      %v1024 = vrot.slane %v575, 7
      %v1025 = vrot.slane %v576, 7
      %v1026 = vrot.slane %v577, 7
      %v1027 = vrot.slane %v578, 7
      %v1028 = vrot.slane %v579, 7
      %v1029 = vrot.slane %v580, 7
      %v1030 = vrot.slane %v581, 7
      %v1031 = vrot.slane %v582, 7
      %v1032 = vrot.slane %v583, 7
      %v1033 = vrot.slane %v584, 7
      %v1034 = vrot.slane %v585, 7
      %v1035 = vrot.slane %v586, 7
      %v1036 = vrot.slane %v587, 7
      %v1037 = vrot.slane %v588, 7
      %v1038 = vrot.slane %v589, 7
      %v1039 = vrot.slane %v590, 7
      %v1040 = vrot.slane %v591, 7
      %v1041 = vrot.slane %v592, 7
      %v1042 = vrot.slane %v593, 7
      %v1043 = vrot.slane %v594, 7
      %v1044 = vrot.slane %v595, 7
      %v1045 = vrot.slane %v596, 7
      %v1046 = vrot.slane %v597, 7
      %v1047 = vrot.slane %v598, 7
      %v1048 = vrot.slane %v599, 7
      %v1049 = vrot.slane %v600, 7
      %v1050 = vrot.slane %v601, 7
      %v1051 = vrot.slane %v602, 7
      %v1052 = vrot.slane %v603, 7
      %v1053 = vrot.slane %v604, 7
      %v1054 = vrot.slane %v605, 7
      %vm1055 = vcmp.lt.s32.totalorder %v607, 1
      %v1056 = vsel %vm1055, %v1053, %v1054
      %v1057 = vsel %vm1055, %v1052, %v1053
      %v1058 = vsel %vm1055, %v1051, %v1052
      %v1059 = vsel %vm1055, %v1050, %v1051
      %v1060 = vsel %vm1055, %v1049, %v1050
      %v1061 = vsel %vm1055, %v1048, %v1049
      %v1062 = vsel %vm1055, %v1047, %v1048
      %v1063 = vsel %vm1055, %v1046, %v1047
      %v1064 = vsel %vm1055, %v1045, %v1046
      %v1065 = vsel %vm1055, %v1044, %v1045
      %v1066 = vsel %vm1055, %v1043, %v1044
      %v1067 = vsel %vm1055, %v1042, %v1043
      %v1068 = vsel %vm1055, %v1041, %v1042
      %v1069 = vsel %vm1055, %v1040, %v1041
      %v1070 = vsel %vm1055, %v1039, %v1040
      %v1071 = vsel %vm1055, %v1038, %v1039
      %v1072 = vsel %vm1055, %v1037, %v1038
      %v1073 = vsel %vm1055, %v1036, %v1037
      %v1074 = vsel %vm1055, %v1035, %v1036
      %v1075 = vsel %vm1055, %v1034, %v1035
      %v1076 = vsel %vm1055, %v1033, %v1034
      %v1077 = vsel %vm1055, %v1032, %v1033
      %v1078 = vsel %vm1055, %v1031, %v1032
      %v1079 = vsel %vm1055, %v1030, %v1031
      %v1080 = vsel %vm1055, %v1029, %v1030
      %v1081 = vsel %vm1055, %v1028, %v1029
      %v1082 = vsel %vm1055, %v1027, %v1028
      %v1083 = vsel %vm1055, %v1026, %v1027
      %v1084 = vsel %vm1055, %v1025, %v1026
      %v1085 = vsel %vm1055, %v1024, %v1025
      %v1086 = vsel %vm1055, %v1023, %v1024
      %v1087 = vsel %vm1055, %v1054, %v1023
      %vm1088 = vcmp.ge.s32.totalorder %v991, 1
      %vm1089 = vcmp.ge.s32.totalorder %v992, 1
      %vm1090 = vcmp.ge.s32.totalorder %v993, 1
      %vm1091 = vcmp.ge.s32.totalorder %v994, 1
      %vm1092 = vcmp.ge.s32.totalorder %v995, 1
      %vm1093 = vcmp.ge.s32.totalorder %v996, 1
      %vm1094 = vcmp.ge.s32.totalorder %v997, 1
      %vm1095 = vcmp.ge.s32.totalorder %v998, 1
      %vm1096 = vcmp.ge.s32.totalorder %v999, 1
      %vm1097 = vcmp.ge.s32.totalorder %v1000, 1
      %vm1098 = vcmp.ge.s32.totalorder %v1001, 1
      %vm1099 = vcmp.ge.s32.totalorder %v1002, 1
      %vm1100 = vcmp.ge.s32.totalorder %v1003, 1
      %vm1101 = vcmp.ge.s32.totalorder %v1004, 1
      %vm1102 = vcmp.ge.s32.totalorder %v1005, 1
      %vm1103 = vcmp.ge.s32.totalorder %v1006, 1
      %vm1104 = vcmp.ge.s32.totalorder %v1007, 1
      %vm1105 = vcmp.ge.s32.totalorder %v1008, 1
      %vm1106 = vcmp.ge.s32.totalorder %v1009, 1
      %vm1107 = vcmp.ge.s32.totalorder %v1010, 1
      %vm1108 = vcmp.ge.s32.totalorder %v1011, 1
      %vm1109 = vcmp.ge.s32.totalorder %v1012, 1
      %vm1110 = vcmp.ge.s32.totalorder %v1013, 1
      %vm1111 = vcmp.ge.s32.totalorder %v1014, 1
      %vm1112 = vcmp.ge.s32.totalorder %v1015, 1
      %vm1113 = vcmp.ge.s32.totalorder %v1016, 1
      %vm1114 = vcmp.ge.s32.totalorder %v1017, 1
      %vm1115 = vcmp.ge.s32.totalorder %v1018, 1
      %vm1116 = vcmp.ge.s32.totalorder %v1019, 1
      %vm1117 = vcmp.ge.s32.totalorder %v1020, 1
      %vm1118 = vcmp.ge.s32.totalorder %v1021, 1
      %vm1119 = vcmp.ge.s32.totalorder %v1022, 1
      %v1120 = vsel %vm1088, %v1087, 0.0
      %v1121 = vsel %vm1089, %v1086, 0.0
      %v1122 = vsel %vm1090, %v1085, 0.0
      %v1123 = vsel %vm1091, %v1084, 0.0
      %v1124 = vsel %vm1092, %v1083, 0.0
      %v1125 = vsel %vm1093, %v1082, 0.0
      %v1126 = vsel %vm1094, %v1081, 0.0
      %v1127 = vsel %vm1095, %v1080, 0.0
      %v1128 = vsel %vm1096, %v1079, 0.0
      %v1129 = vsel %vm1097, %v1078, 0.0
      %v1130 = vsel %vm1098, %v1077, 0.0
      %v1131 = vsel %vm1099, %v1076, 0.0
      %v1132 = vsel %vm1100, %v1075, 0.0
      %v1133 = vsel %vm1101, %v1074, 0.0
      %v1134 = vsel %vm1102, %v1073, 0.0
      %v1135 = vsel %vm1103, %v1072, 0.0
      %v1136 = vsel %vm1104, %v1071, 0.0
      %v1137 = vsel %vm1105, %v1070, 0.0
      %v1138 = vsel %vm1106, %v1069, 0.0
      %v1139 = vsel %vm1107, %v1068, 0.0
      %v1140 = vsel %vm1108, %v1067, 0.0
      %v1141 = vsel %vm1109, %v1066, 0.0
      %v1142 = vsel %vm1110, %v1065, 0.0
      %v1143 = vsel %vm1111, %v1064, 0.0
      %v1144 = vsel %vm1112, %v1063, 0.0
      %v1145 = vsel %vm1113, %v1062, 0.0
      %v1146 = vsel %vm1114, %v1061, 0.0
      %v1147 = vsel %vm1115, %v1060, 0.0
      %v1148 = vsel %vm1116, %v1059, 0.0
      %v1149 = vsel %vm1117, %v1058, 0.0
      %v1150 = vsel %vm1118, %v1057, 0.0
      %v1151 = vsel %vm1119, %v1056, 0.0
      %v1152 = vrot.slane %v574, 1
      %v1153 = vrot.slane %v575, 1
      %v1154 = vrot.slane %v576, 1
      %v1155 = vrot.slane %v577, 1
      %v1156 = vrot.slane %v578, 1
      %v1157 = vrot.slane %v579, 1
      %v1158 = vrot.slane %v580, 1
      %v1159 = vrot.slane %v581, 1
      %v1160 = vrot.slane %v582, 1
      %v1161 = vrot.slane %v583, 1
      %v1162 = vrot.slane %v584, 1
      %v1163 = vrot.slane %v585, 1
      %v1164 = vrot.slane %v586, 1
      %v1165 = vrot.slane %v587, 1
      %v1166 = vrot.slane %v588, 1
      %v1167 = vrot.slane %v589, 1
      %v1168 = vrot.slane %v590, 1
      %v1169 = vrot.slane %v591, 1
      %v1170 = vrot.slane %v592, 1
      %v1171 = vrot.slane %v593, 1
      %v1172 = vrot.slane %v594, 1
      %v1173 = vrot.slane %v595, 1
      %v1174 = vrot.slane %v596, 1
      %v1175 = vrot.slane %v597, 1
      %v1176 = vrot.slane %v598, 1
      %v1177 = vrot.slane %v599, 1
      %v1178 = vrot.slane %v600, 1
      %v1179 = vrot.slane %v601, 1
      %v1180 = vrot.slane %v602, 1
      %v1181 = vrot.slane %v603, 1
      %v1182 = vrot.slane %v604, 1
      %v1183 = vrot.slane %v605, 1
      %vm1184 = vcmp.lt.s32.totalorder %v607, 7
      %v1185 = vsel %vm1184, %v1182, %v1183
      %v1186 = vsel %vm1184, %v1181, %v1182
      %v1187 = vsel %vm1184, %v1180, %v1181
      %v1188 = vsel %vm1184, %v1179, %v1180
      %v1189 = vsel %vm1184, %v1178, %v1179
      %v1190 = vsel %vm1184, %v1177, %v1178
      %v1191 = vsel %vm1184, %v1176, %v1177
      %v1192 = vsel %vm1184, %v1175, %v1176
      %v1193 = vsel %vm1184, %v1174, %v1175
      %v1194 = vsel %vm1184, %v1173, %v1174
      %v1195 = vsel %vm1184, %v1172, %v1173
      %v1196 = vsel %vm1184, %v1171, %v1172
      %v1197 = vsel %vm1184, %v1170, %v1171
      %v1198 = vsel %vm1184, %v1169, %v1170
      %v1199 = vsel %vm1184, %v1168, %v1169
      %v1200 = vsel %vm1184, %v1167, %v1168
      %v1201 = vsel %vm1184, %v1166, %v1167
      %v1202 = vsel %vm1184, %v1165, %v1166
      %v1203 = vsel %vm1184, %v1164, %v1165
      %v1204 = vsel %vm1184, %v1163, %v1164
      %v1205 = vsel %vm1184, %v1162, %v1163
      %v1206 = vsel %vm1184, %v1161, %v1162
      %v1207 = vsel %vm1184, %v1160, %v1161
      %v1208 = vsel %vm1184, %v1159, %v1160
      %v1209 = vsel %vm1184, %v1158, %v1159
      %v1210 = vsel %vm1184, %v1157, %v1158
      %v1211 = vsel %vm1184, %v1156, %v1157
      %v1212 = vsel %vm1184, %v1155, %v1156
      %v1213 = vsel %vm1184, %v1154, %v1155
      %v1214 = vsel %vm1184, %v1153, %v1154
      %v1215 = vsel %vm1184, %v1152, %v1153
      %v1216 = vsel %vm1184, %v1183, %v1152
      %vm1217 = vcmp.le.s32.totalorder %v991, 14
      %vm1218 = vcmp.le.s32.totalorder %v992, 14
      %vm1219 = vcmp.le.s32.totalorder %v993, 14
      %vm1220 = vcmp.le.s32.totalorder %v994, 14
      %vm1221 = vcmp.le.s32.totalorder %v995, 14
      %vm1222 = vcmp.le.s32.totalorder %v996, 14
      %vm1223 = vcmp.le.s32.totalorder %v997, 14
      %vm1224 = vcmp.le.s32.totalorder %v998, 14
      %vm1225 = vcmp.le.s32.totalorder %v999, 14
      %vm1226 = vcmp.le.s32.totalorder %v1000, 14
      %vm1227 = vcmp.le.s32.totalorder %v1001, 14
      %vm1228 = vcmp.le.s32.totalorder %v1002, 14
      %vm1229 = vcmp.le.s32.totalorder %v1003, 14
      %vm1230 = vcmp.le.s32.totalorder %v1004, 14
      %vm1231 = vcmp.le.s32.totalorder %v1005, 14
      %vm1232 = vcmp.le.s32.totalorder %v1006, 14
      %vm1233 = vcmp.le.s32.totalorder %v1007, 14
      %vm1234 = vcmp.le.s32.totalorder %v1008, 14
      %vm1235 = vcmp.le.s32.totalorder %v1009, 14
      %vm1236 = vcmp.le.s32.totalorder %v1010, 14
      %vm1237 = vcmp.le.s32.totalorder %v1011, 14
      %vm1238 = vcmp.le.s32.totalorder %v1012, 14
      %vm1239 = vcmp.le.s32.totalorder %v1013, 14
      %vm1240 = vcmp.le.s32.totalorder %v1014, 14
      %vm1241 = vcmp.le.s32.totalorder %v1015, 14
      %vm1242 = vcmp.le.s32.totalorder %v1016, 14
      %vm1243 = vcmp.le.s32.totalorder %v1017, 14
      %vm1244 = vcmp.le.s32.totalorder %v1018, 14
      %vm1245 = vcmp.le.s32.totalorder %v1019, 14
      %vm1246 = vcmp.le.s32.totalorder %v1020, 14
      %vm1247 = vcmp.le.s32.totalorder %v1021, 14
      %vm1248 = vcmp.le.s32.totalorder %v1022, 14
      %v1249 = vsel %vm1217, %v1215, 0.0
      %v1250 = vsel %vm1218, %v1214, 0.0
      %v1251 = vsel %vm1219, %v1213, 0.0
      %v1252 = vsel %vm1220, %v1212, 0.0
      %v1253 = vsel %vm1221, %v1211, 0.0
      %v1254 = vsel %vm1222, %v1210, 0.0
      %v1255 = vsel %vm1223, %v1209, 0.0
      %v1256 = vsel %vm1224, %v1208, 0.0
      %v1257 = vsel %vm1225, %v1207, 0.0
      %v1258 = vsel %vm1226, %v1206, 0.0
      %v1259 = vsel %vm1227, %v1205, 0.0
      %v1260 = vsel %vm1228, %v1204, 0.0
      %v1261 = vsel %vm1229, %v1203, 0.0
      %v1262 = vsel %vm1230, %v1202, 0.0
      %v1263 = vsel %vm1231, %v1201, 0.0
      %v1264 = vsel %vm1232, %v1200, 0.0
      %v1265 = vsel %vm1233, %v1199, 0.0
      %v1266 = vsel %vm1234, %v1198, 0.0
      %v1267 = vsel %vm1235, %v1197, 0.0
      %v1268 = vsel %vm1236, %v1196, 0.0
      %v1269 = vsel %vm1237, %v1195, 0.0
      %v1270 = vsel %vm1238, %v1194, 0.0
      %v1271 = vsel %vm1239, %v1193, 0.0
      %v1272 = vsel %vm1240, %v1192, 0.0
      %v1273 = vsel %vm1241, %v1191, 0.0
      %v1274 = vsel %vm1242, %v1190, 0.0
      %v1275 = vsel %vm1243, %v1189, 0.0
      %v1276 = vsel %vm1244, %v1188, 0.0
      %v1277 = vsel %vm1245, %v1187, 0.0
      %v1278 = vsel %vm1246, %v1186, 0.0
      %v1279 = vsel %vm1247, %v1185, 0.0
      %v1280 = vsel %vm1248, %v1216, 0.0
      %v1281 = vpack.c.bf16 0.0, 0.0
      %v1282 = vpack.c.bf16 %v1121, %v1120
      %v1283 = vpack.c.bf16 %v1123, %v1122
      %v1284 = vpack.c.bf16 %v1125, %v1124
      %v1285 = vpack.c.bf16 %v1127, %v1126
      %v1286 = vpack.c.bf16 %v1129, %v1128
      %v1287 = vpack.c.bf16 %v1131, %v1130
      %v1288 = vpack.c.bf16 %v1133, %v1132
      %v1289 = vpack.c.bf16 %v1135, %v1134
      %v1290 = vpack.c.bf16 %v1137, %v1136
      %v1291 = vpack.c.bf16 %v1139, %v1138
      %v1292 = vpack.c.bf16 %v1141, %v1140
      %v1293 = vpack.c.bf16 %v1143, %v1142
      %v1294 = vpack.c.bf16 %v1145, %v1144
      %v1295 = vpack.c.bf16 %v1147, %v1146
      %v1296 = vpack.c.bf16 %v1149, %v1148
      %v1297 = vld [vmem:[%s3] sm:$0x3]
      %v1298 = vpack.c.bf16 %v575, %v574
      %v1299 = vpack.c.bf16 %v577, %v576
      %v1300 = vpack.c.bf16 %v579, %v578
      %v1301 = vpack.c.bf16 %v581, %v580
      %v1302 = vpack.c.bf16 %v583, %v582
      %v1303 = vpack.c.bf16 %v585, %v584
      %v1304 = vpack.c.bf16 %v587, %v586
      %v1305 = vpack.c.bf16 %v589, %v588
      %v1306 = vpack.c.bf16 %v591, %v590
      %v1307 = vpack.c.bf16 %v593, %v592
      %v1308 = vpack.c.bf16 %v595, %v594
      %v1309 = vpack.c.bf16 %v597, %v596
      %v1310 = vpack.c.bf16 %v599, %v598
      %v1311 = vpack.c.bf16 %v601, %v600
      %v1312 = vpack.c.bf16 %v603, %v602
      %s1313 = scalar_lea.vmem %s3, 2
      %v1314 = vld [vmem:[%s1313] sm:$0x3]
      %vm1315 = vcmask 31744
      %v1317 = vsel %vm1315, %v1281, 0
      %v1320 = vsel %vm1315, %v1298, 0
      %v1323 = vsel %vm1315, %v1299, 0
      %v1326 = vsel %vm1315, %v1300, 0
      %v1329 = vsel %vm1315, %v1301, 0
      %v1332 = vsel %vm1315, %v1302, 0
      %v1335 = vsel %vm1315, %v1303, 0
      %v1338 = vsel %vm1315, %v1304, 0
      %v1341 = vsel %vm1315, %v1305, 0
      %v1344 = vsel %vm1315, %v1306, 0
      %v1347 = vsel %vm1315, %v1307, 0
      %v1350 = vsel %vm1315, %v1308, 0
      %v1353 = vsel %vm1315, %v1309, 0
      %v1356 = vsel %vm1315, %v1310, 0
      %v1359 = vsel %vm1315, %v1311, 0
      %v1362 = vsel %vm1315, %v1312, 0
      %vm1364 = vcmask 1041408
      %v1366 = vsel %vm1364, %v1314, 0
      %1368 = vmatpush.bf16.msra.mxu0 0
      %1369 = vmatpush.bf16.msra.mxu0 0
      %1370 = vmatpush.bf16.msra.mxu0 0
      %1371 = vmatpush.bf16.msra.mxu0 0
      %1372 = vmatpush.bf16.msra.mxu0 0
      %1373 = vmatpush.bf16.msra.mxu0 0
      %1374 = vmatpush.bf16.msra.mxu0 0
      %1375 = vmatpush.bf16.msra.mxu0 %v1366
      %1376 = vmatmul.bf16.gmra.mxu0 %v1317
      %v1377 = vpop.f32.mrf.mxu0
      %v1378 = vadd.f32 0.0, %v1377
      %v1379 = vpop.f32.mrf.mxu0
      %v1380 = vadd.f32 0.0, %v1379
      %1381 = vmatmul.bf16.gmra.mxu0 %v1320
      %v1382 = vpop.f32.mrf.mxu0
      %v1383 = vadd.f32 0.0, %v1382
      %v1384 = vpop.f32.mrf.mxu0
      %v1385 = vadd.f32 0.0, %v1384
      %1386 = vmatmul.bf16.gmra.mxu0 %v1323
      %v1387 = vpop.f32.mrf.mxu0
      %v1388 = vadd.f32 0.0, %v1387
      %v1389 = vpop.f32.mrf.mxu0
      %v1390 = vadd.f32 0.0, %v1389
      %1391 = vmatmul.bf16.gmra.mxu0 %v1326
      %v1392 = vpop.f32.mrf.mxu0
      %v1393 = vadd.f32 0.0, %v1392
      %v1394 = vpop.f32.mrf.mxu0
      %v1395 = vadd.f32 0.0, %v1394
      %1396 = vmatmul.bf16.gmra.mxu0 %v1329
      %v1397 = vpop.f32.mrf.mxu0
      %v1398 = vadd.f32 0.0, %v1397
      %v1399 = vpop.f32.mrf.mxu0
      %v1400 = vadd.f32 0.0, %v1399
      %1401 = vmatmul.bf16.gmra.mxu0 %v1332
      %v1402 = vpop.f32.mrf.mxu0
      %v1403 = vadd.f32 0.0, %v1402
      %v1404 = vpop.f32.mrf.mxu0
      %v1405 = vadd.f32 0.0, %v1404
      %1406 = vmatmul.bf16.gmra.mxu0 %v1335
      %v1407 = vpop.f32.mrf.mxu0
      %v1408 = vadd.f32 0.0, %v1407
      %v1409 = vpop.f32.mrf.mxu0
      %v1410 = vadd.f32 0.0, %v1409
      %1411 = vmatmul.bf16.gmra.mxu0 %v1338
      %v1412 = vpop.f32.mrf.mxu0
      %v1413 = vadd.f32 0.0, %v1412
      %v1414 = vpop.f32.mrf.mxu0
      %v1415 = vadd.f32 0.0, %v1414
      %1416 = vmatmul.bf16.gmra.mxu0 %v1341
      %v1417 = vpop.f32.mrf.mxu0
      %v1418 = vadd.f32 0.0, %v1417
      %v1419 = vpop.f32.mrf.mxu0
      %v1420 = vadd.f32 0.0, %v1419
      %1421 = vmatmul.bf16.gmra.mxu0 %v1344
      %v1422 = vpop.f32.mrf.mxu0
      %v1423 = vadd.f32 0.0, %v1422
      %v1424 = vpop.f32.mrf.mxu0
      %v1425 = vadd.f32 0.0, %v1424
      %1426 = vmatmul.bf16.gmra.mxu0 %v1347
      %v1427 = vpop.f32.mrf.mxu0
      %v1428 = vadd.f32 0.0, %v1427
      %v1429 = vpop.f32.mrf.mxu0
      %v1430 = vadd.f32 0.0, %v1429
      %1431 = vmatmul.bf16.gmra.mxu0 %v1350
      %v1432 = vpop.f32.mrf.mxu0
      %v1433 = vadd.f32 0.0, %v1432
      %v1434 = vpop.f32.mrf.mxu0
      %v1435 = vadd.f32 0.0, %v1434
      %1436 = vmatmul.bf16.gmra.mxu0 %v1353
      %v1437 = vpop.f32.mrf.mxu0
      %v1438 = vadd.f32 0.0, %v1437
      %v1439 = vpop.f32.mrf.mxu0
      %v1440 = vadd.f32 0.0, %v1439
      %1441 = vmatmul.bf16.gmra.mxu0 %v1356
      %v1442 = vpop.f32.mrf.mxu0
      %v1443 = vadd.f32 0.0, %v1442
      %v1444 = vpop.f32.mrf.mxu0
      %v1445 = vadd.f32 0.0, %v1444
      %1446 = vmatmul.bf16.gmra.mxu0 %v1359
      %v1447 = vpop.f32.mrf.mxu0
      %v1448 = vadd.f32 0.0, %v1447
      %v1449 = vpop.f32.mrf.mxu0
      %v1450 = vadd.f32 0.0, %v1449
      %1451 = vmatmul.bf16.gmra.mxu0 %v1362
      %v1452 = vpop.f32.mrf.mxu0
      %v1453 = vadd.f32 0.0, %v1452
      %v1454 = vpop.f32.mrf.mxu0
      %v1455 = vadd.f32 0.0, %v1454
      %1456 = vdwg.mxu0
      %v1458 = vsel %vm1315, %v1282, 0
      %v1461 = vsel %vm1315, %v1283, 0
      %v1464 = vsel %vm1315, %v1284, 0
      %v1467 = vsel %vm1315, %v1285, 0
      %v1470 = vsel %vm1315, %v1286, 0
      %v1473 = vsel %vm1315, %v1287, 0
      %v1476 = vsel %vm1315, %v1288, 0
      %v1479 = vsel %vm1315, %v1289, 0
      %v1482 = vsel %vm1315, %v1290, 0
      %v1485 = vsel %vm1315, %v1291, 0
      %v1488 = vsel %vm1315, %v1292, 0
      %v1491 = vsel %vm1315, %v1293, 0
      %v1494 = vsel %vm1315, %v1294, 0
      %v1497 = vsel %vm1315, %v1295, 0
      %v1500 = vsel %vm1315, %v1296, 0
      %v1503 = vsel %vm1364, %v1297, 0
      %1505 = vmatpush.bf16.msra.mxu0 0
      %1506 = vmatpush.bf16.msra.mxu0 0
      %1507 = vmatpush.bf16.msra.mxu0 0
      %1508 = vmatpush.bf16.msra.mxu0 0
      %1509 = vmatpush.bf16.msra.mxu0 0
      %1510 = vmatpush.bf16.msra.mxu0 0
      %1511 = vmatpush.bf16.msra.mxu0 0
      %1512 = vmatpush.bf16.msra.mxu0 %v1503
      %1513 = vmatmul.bf16.gmra.mxu0 %v1317
      %v1514 = vpop.f32.mrf.mxu0
      %v1515 = vadd.f32 %v1378, %v1514
      %v1516 = vpop.f32.mrf.mxu0
      %v1517 = vadd.f32 %v1380, %v1516
      %1518 = vmatmul.bf16.gmra.mxu0 %v1458
      %v1519 = vpop.f32.mrf.mxu0
      %v1520 = vadd.f32 %v1383, %v1519
      %v1521 = vpop.f32.mrf.mxu0
      %v1522 = vadd.f32 %v1385, %v1521
      %1523 = vmatmul.bf16.gmra.mxu0 %v1461
      %v1524 = vpop.f32.mrf.mxu0
      %v1525 = vadd.f32 %v1388, %v1524
      %v1526 = vpop.f32.mrf.mxu0
      %v1527 = vadd.f32 %v1390, %v1526
      %1528 = vmatmul.bf16.gmra.mxu0 %v1464
      %v1529 = vpop.f32.mrf.mxu0
      %v1530 = vadd.f32 %v1393, %v1529
      %v1531 = vpop.f32.mrf.mxu0
      %v1532 = vadd.f32 %v1395, %v1531
      %1533 = vmatmul.bf16.gmra.mxu0 %v1467
      %v1534 = vpop.f32.mrf.mxu0
      %v1535 = vadd.f32 %v1398, %v1534
      %v1536 = vpop.f32.mrf.mxu0
      %v1537 = vadd.f32 %v1400, %v1536
      %1538 = vmatmul.bf16.gmra.mxu0 %v1470
      %v1539 = vpop.f32.mrf.mxu0
      %v1540 = vadd.f32 %v1403, %v1539
      %v1541 = vpop.f32.mrf.mxu0
      %v1542 = vadd.f32 %v1405, %v1541
      %1543 = vmatmul.bf16.gmra.mxu0 %v1473
      %v1544 = vpop.f32.mrf.mxu0
      %v1545 = vadd.f32 %v1408, %v1544
      %v1546 = vpop.f32.mrf.mxu0
      %v1547 = vadd.f32 %v1410, %v1546
      %1548 = vmatmul.bf16.gmra.mxu0 %v1476
      %v1549 = vpop.f32.mrf.mxu0
      %v1550 = vadd.f32 %v1413, %v1549
      %v1551 = vpop.f32.mrf.mxu0
      %v1552 = vadd.f32 %v1415, %v1551
      %1553 = vmatmul.bf16.gmra.mxu0 %v1479
      %v1554 = vpop.f32.mrf.mxu0
      %v1555 = vadd.f32 %v1418, %v1554
      %v1556 = vpop.f32.mrf.mxu0
      %v1557 = vadd.f32 %v1420, %v1556
      %1558 = vmatmul.bf16.gmra.mxu0 %v1482
      %v1559 = vpop.f32.mrf.mxu0
      %v1560 = vadd.f32 %v1423, %v1559
      %v1561 = vpop.f32.mrf.mxu0
      %v1562 = vadd.f32 %v1425, %v1561
      %1563 = vmatmul.bf16.gmra.mxu0 %v1485
      %v1564 = vpop.f32.mrf.mxu0
      %v1565 = vadd.f32 %v1428, %v1564
      %v1566 = vpop.f32.mrf.mxu0
      %v1567 = vadd.f32 %v1430, %v1566
      %1568 = vmatmul.bf16.gmra.mxu0 %v1488
      %v1569 = vpop.f32.mrf.mxu0
      %v1570 = vadd.f32 %v1433, %v1569
      %v1571 = vpop.f32.mrf.mxu0
      %v1572 = vadd.f32 %v1435, %v1571
      %1573 = vmatmul.bf16.gmra.mxu0 %v1491
      %v1574 = vpop.f32.mrf.mxu0
      %v1575 = vadd.f32 %v1438, %v1574
      %v1576 = vpop.f32.mrf.mxu0
      %v1577 = vadd.f32 %v1440, %v1576
      %1578 = vmatmul.bf16.gmra.mxu0 %v1494
      %v1579 = vpop.f32.mrf.mxu0
      %v1580 = vadd.f32 %v1443, %v1579
      %v1581 = vpop.f32.mrf.mxu0
      %v1582 = vadd.f32 %v1445, %v1581
      %1583 = vmatmul.bf16.gmra.mxu0 %v1497
      %v1584 = vpop.f32.mrf.mxu0
      %v1585 = vadd.f32 %v1448, %v1584
      %v1586 = vpop.f32.mrf.mxu0
      %v1587 = vadd.f32 %v1450, %v1586
      %1588 = vmatmul.bf16.gmra.mxu0 %v1500
      %v1589 = vpop.f32.mrf.mxu0
      %v1590 = vadd.f32 %v1453, %v1589
      %v1591 = vpop.f32.mrf.mxu0
      %v1592 = vadd.f32 %v1455, %v1591
      %1593 = vdwg.mxu0
      %v1594 = vpack.c.bf16 %v1250, %v1249
      %v1595 = vpack.c.bf16 %v1252, %v1251
      %v1596 = vpack.c.bf16 %v1254, %v1253
      %v1597 = vpack.c.bf16 %v1256, %v1255
      %v1598 = vpack.c.bf16 %v1258, %v1257
      %v1599 = vpack.c.bf16 %v1260, %v1259
      %v1600 = vpack.c.bf16 %v1262, %v1261
      %v1601 = vpack.c.bf16 %v1264, %v1263
      %v1602 = vpack.c.bf16 %v1266, %v1265
      %v1603 = vpack.c.bf16 %v1268, %v1267
      %v1604 = vpack.c.bf16 %v1270, %v1269
      %v1605 = vpack.c.bf16 %v1272, %v1271
      %v1606 = vpack.c.bf16 %v1274, %v1273
      %v1607 = vpack.c.bf16 %v1276, %v1275
      %v1608 = vpack.c.bf16 %v1278, %v1277
      %s1609 = scalar_lea.vmem %s3, 4
      %v1610 = vld [vmem:[%s1609] sm:$0x3]
      %v1612 = vsel %vm1315, %v1594, 0
      %v1615 = vsel %vm1315, %v1595, 0
      %v1618 = vsel %vm1315, %v1596, 0
      %v1621 = vsel %vm1315, %v1597, 0
      %v1624 = vsel %vm1315, %v1598, 0
      %v1627 = vsel %vm1315, %v1599, 0
      %v1630 = vsel %vm1315, %v1600, 0
      %v1633 = vsel %vm1315, %v1601, 0
      %v1636 = vsel %vm1315, %v1602, 0
      %v1639 = vsel %vm1315, %v1603, 0
      %v1642 = vsel %vm1315, %v1604, 0
      %v1645 = vsel %vm1315, %v1605, 0
      %v1648 = vsel %vm1315, %v1606, 0
      %v1651 = vsel %vm1315, %v1607, 0
      %v1654 = vsel %vm1315, %v1608, 0
      %v1657 = vsel %vm1364, %v1610, 0
      %1659 = vmatpush.bf16.msra.mxu0 0
      %1660 = vmatpush.bf16.msra.mxu0 0
      %1661 = vmatpush.bf16.msra.mxu0 0
      %1662 = vmatpush.bf16.msra.mxu0 0
      %1663 = vmatpush.bf16.msra.mxu0 0
      %1664 = vmatpush.bf16.msra.mxu0 0
      %1665 = vmatpush.bf16.msra.mxu0 0
      %1666 = vmatpush.bf16.msra.mxu0 %v1657
      %1667 = vmatmul.bf16.gmra.mxu0 %v1317
      %v1668 = vpop.f32.mrf.mxu0
      %v1669 = vadd.f32 0.0, %v1668
      %v1670 = vpop.f32.mrf.mxu0
      %v1671 = vadd.f32 0.0, %v1670
      %1672 = vmatmul.bf16.gmra.mxu0 %v1612
      %v1673 = vpop.f32.mrf.mxu0
      %v1674 = vadd.f32 0.0, %v1673
      %v1675 = vpop.f32.mrf.mxu0
      %v1676 = vadd.f32 0.0, %v1675
      %1677 = vmatmul.bf16.gmra.mxu0 %v1615
      %v1678 = vpop.f32.mrf.mxu0
      %v1679 = vadd.f32 0.0, %v1678
      %v1680 = vpop.f32.mrf.mxu0
      %v1681 = vadd.f32 0.0, %v1680
      %1682 = vmatmul.bf16.gmra.mxu0 %v1618
      %v1683 = vpop.f32.mrf.mxu0
      %v1684 = vadd.f32 0.0, %v1683
      %v1685 = vpop.f32.mrf.mxu0
      %v1686 = vadd.f32 0.0, %v1685
      %1687 = vmatmul.bf16.gmra.mxu0 %v1621
      %v1688 = vpop.f32.mrf.mxu0
      %v1689 = vadd.f32 0.0, %v1688
      %v1690 = vpop.f32.mrf.mxu0
      %v1691 = vadd.f32 0.0, %v1690
      %1692 = vmatmul.bf16.gmra.mxu0 %v1624
      %v1693 = vpop.f32.mrf.mxu0
      %v1694 = vadd.f32 0.0, %v1693
      %v1695 = vpop.f32.mrf.mxu0
      %v1696 = vadd.f32 0.0, %v1695
      %1697 = vmatmul.bf16.gmra.mxu0 %v1627
      %v1698 = vpop.f32.mrf.mxu0
      %v1699 = vadd.f32 0.0, %v1698
      %v1700 = vpop.f32.mrf.mxu0
      %v1701 = vadd.f32 0.0, %v1700
      %1702 = vmatmul.bf16.gmra.mxu0 %v1630
      %v1703 = vpop.f32.mrf.mxu0
      %v1704 = vadd.f32 0.0, %v1703
      %v1705 = vpop.f32.mrf.mxu0
      %v1706 = vadd.f32 0.0, %v1705
      %1707 = vmatmul.bf16.gmra.mxu0 %v1633
      %v1708 = vpop.f32.mrf.mxu0
      %v1709 = vadd.f32 0.0, %v1708
      %v1710 = vpop.f32.mrf.mxu0
      %v1711 = vadd.f32 0.0, %v1710
      %1712 = vmatmul.bf16.gmra.mxu0 %v1636
      %v1713 = vpop.f32.mrf.mxu0
      %v1714 = vadd.f32 0.0, %v1713
      %v1715 = vpop.f32.mrf.mxu0
      %v1716 = vadd.f32 0.0, %v1715
      %1717 = vmatmul.bf16.gmra.mxu0 %v1639
      %v1718 = vpop.f32.mrf.mxu0
      %v1719 = vadd.f32 0.0, %v1718
      %v1720 = vpop.f32.mrf.mxu0
      %v1721 = vadd.f32 0.0, %v1720
      %1722 = vmatmul.bf16.gmra.mxu0 %v1642
      %v1723 = vpop.f32.mrf.mxu0
      %v1724 = vadd.f32 0.0, %v1723
      %v1725 = vpop.f32.mrf.mxu0
      %v1726 = vadd.f32 0.0, %v1725
      %1727 = vmatmul.bf16.gmra.mxu0 %v1645
      %v1728 = vpop.f32.mrf.mxu0
      %v1729 = vadd.f32 0.0, %v1728
      %v1730 = vpop.f32.mrf.mxu0
      %v1731 = vadd.f32 0.0, %v1730
      %1732 = vmatmul.bf16.gmra.mxu0 %v1648
      %v1733 = vpop.f32.mrf.mxu0
      %v1734 = vadd.f32 0.0, %v1733
      %v1735 = vpop.f32.mrf.mxu0
      %v1736 = vadd.f32 0.0, %v1735
      %1737 = vmatmul.bf16.gmra.mxu0 %v1651
      %v1738 = vpop.f32.mrf.mxu0
      %v1739 = vadd.f32 0.0, %v1738
      %v1740 = vpop.f32.mrf.mxu0
      %v1741 = vadd.f32 0.0, %v1740
      %1742 = vmatmul.bf16.gmra.mxu0 %v1654
      %v1743 = vpop.f32.mrf.mxu0
      %v1744 = vadd.f32 0.0, %v1743
      %v1745 = vpop.f32.mrf.mxu0
      %v1746 = vadd.f32 0.0, %v1745
      %1747 = vdwg.mxu0
      %v1748 = vadd.f32 %v1515, %v1669
      %v1749 = vadd.f32 %v1517, %v1671
      %v1750 = vadd.f32 %v1520, %v1674
      %v1751 = vadd.f32 %v1522, %v1676
      %v1752 = vadd.f32 %v1525, %v1679
      %v1753 = vadd.f32 %v1527, %v1681
      %v1754 = vadd.f32 %v1530, %v1684
      %v1755 = vadd.f32 %v1532, %v1686
      %v1756 = vadd.f32 %v1535, %v1689
      %v1757 = vadd.f32 %v1537, %v1691
      %v1758 = vadd.f32 %v1540, %v1694
      %v1759 = vadd.f32 %v1542, %v1696
      %v1760 = vadd.f32 %v1545, %v1699
      %v1761 = vadd.f32 %v1547, %v1701
      %v1762 = vadd.f32 %v1550, %v1704
      %v1763 = vadd.f32 %v1552, %v1706
      %v1764 = vadd.f32 %v1555, %v1709
      %v1765 = vadd.f32 %v1557, %v1711
      %v1766 = vadd.f32 %v1560, %v1714
      %v1767 = vadd.f32 %v1562, %v1716
      %v1768 = vadd.f32 %v1565, %v1719
      %v1769 = vadd.f32 %v1567, %v1721
      %v1770 = vadd.f32 %v1570, %v1724
      %v1771 = vadd.f32 %v1572, %v1726
      %v1772 = vadd.f32 %v1575, %v1729
      %v1773 = vadd.f32 %v1577, %v1731
      %v1774 = vadd.f32 %v1580, %v1734
      %v1775 = vadd.f32 %v1582, %v1736
      %v1776 = vadd.f32 %v1585, %v1739
      %v1777 = vadd.f32 %v1587, %v1741
      %v1778 = vadd.f32 %v1590, %v1744
      %v1779 = vadd.f32 %v1592, %v1746
      %v1780 = vpack.c.bf16 %v1151, %v1150
      %s1781 = scalar_lea.vmem %s3, 6
      %v1782 = vld [vmem:[%s1781] sm:$0x3]
      %v1784 = vsel %vm1315, %v1780, 0
      %v1787 = vsel %vm1364, %v1782, 0
      %1789 = vmatpush.bf16.msra.mxu0 0
      %1790 = vmatpush.bf16.msra.mxu0 0
      %1791 = vmatpush.bf16.msra.mxu0 0
      %1792 = vmatpush.bf16.msra.mxu0 0
      %1793 = vmatpush.bf16.msra.mxu0 0
      %1794 = vmatpush.bf16.msra.mxu0 0
      %1795 = vmatpush.bf16.msra.mxu0 0
      %1796 = vmatpush.bf16.msra.mxu0 %v1787
      %1797 = vmatmul.bf16.gmra.mxu0 %v1458
      %v1798 = vpop.f32.mrf.mxu0
      %v1799 = vadd.f32 0.0, %v1798
      %v1800 = vpop.f32.mrf.mxu0
      %v1801 = vadd.f32 0.0, %v1800
      %1802 = vmatmul.bf16.gmra.mxu0 %v1461
      %v1803 = vpop.f32.mrf.mxu0
      %v1804 = vadd.f32 0.0, %v1803
      %v1805 = vpop.f32.mrf.mxu0
      %v1806 = vadd.f32 0.0, %v1805
      %1807 = vmatmul.bf16.gmra.mxu0 %v1464
      %v1808 = vpop.f32.mrf.mxu0
      %v1809 = vadd.f32 0.0, %v1808
      %v1810 = vpop.f32.mrf.mxu0
      %v1811 = vadd.f32 0.0, %v1810
      %1812 = vmatmul.bf16.gmra.mxu0 %v1467
      %v1813 = vpop.f32.mrf.mxu0
      %v1814 = vadd.f32 0.0, %v1813
      %v1815 = vpop.f32.mrf.mxu0
      %v1816 = vadd.f32 0.0, %v1815
      %1817 = vmatmul.bf16.gmra.mxu0 %v1470
      %v1818 = vpop.f32.mrf.mxu0
      %v1819 = vadd.f32 0.0, %v1818
      %v1820 = vpop.f32.mrf.mxu0
      %v1821 = vadd.f32 0.0, %v1820
      %1822 = vmatmul.bf16.gmra.mxu0 %v1473
      %v1823 = vpop.f32.mrf.mxu0
      %v1824 = vadd.f32 0.0, %v1823
      %v1825 = vpop.f32.mrf.mxu0
      %v1826 = vadd.f32 0.0, %v1825
      %1827 = vmatmul.bf16.gmra.mxu0 %v1476
      %v1828 = vpop.f32.mrf.mxu0
      %v1829 = vadd.f32 0.0, %v1828
      %v1830 = vpop.f32.mrf.mxu0
      %v1831 = vadd.f32 0.0, %v1830
      %1832 = vmatmul.bf16.gmra.mxu0 %v1479
      %v1833 = vpop.f32.mrf.mxu0
      %v1834 = vadd.f32 0.0, %v1833
      %v1835 = vpop.f32.mrf.mxu0
      %v1836 = vadd.f32 0.0, %v1835
      %1837 = vmatmul.bf16.gmra.mxu0 %v1482
      %v1838 = vpop.f32.mrf.mxu0
      %v1839 = vadd.f32 0.0, %v1838
      %v1840 = vpop.f32.mrf.mxu0
      %v1841 = vadd.f32 0.0, %v1840
      %1842 = vmatmul.bf16.gmra.mxu0 %v1485
      %v1843 = vpop.f32.mrf.mxu0
      %v1844 = vadd.f32 0.0, %v1843
      %v1845 = vpop.f32.mrf.mxu0
      %v1846 = vadd.f32 0.0, %v1845
      %1847 = vmatmul.bf16.gmra.mxu0 %v1488
      %v1848 = vpop.f32.mrf.mxu0
      %v1849 = vadd.f32 0.0, %v1848
      %v1850 = vpop.f32.mrf.mxu0
      %v1851 = vadd.f32 0.0, %v1850
      %1852 = vmatmul.bf16.gmra.mxu0 %v1491
      %v1853 = vpop.f32.mrf.mxu0
      %v1854 = vadd.f32 0.0, %v1853
      %v1855 = vpop.f32.mrf.mxu0
      %v1856 = vadd.f32 0.0, %v1855
      %1857 = vmatmul.bf16.gmra.mxu0 %v1494
      %v1858 = vpop.f32.mrf.mxu0
      %v1859 = vadd.f32 0.0, %v1858
      %v1860 = vpop.f32.mrf.mxu0
      %v1861 = vadd.f32 0.0, %v1860
      %1862 = vmatmul.bf16.gmra.mxu0 %v1497
      %v1863 = vpop.f32.mrf.mxu0
      %v1864 = vadd.f32 0.0, %v1863
      %v1865 = vpop.f32.mrf.mxu0
      %v1866 = vadd.f32 0.0, %v1865
      %1867 = vmatmul.bf16.gmra.mxu0 %v1500
      %v1868 = vpop.f32.mrf.mxu0
      %v1869 = vadd.f32 0.0, %v1868
      %v1870 = vpop.f32.mrf.mxu0
      %v1871 = vadd.f32 0.0, %v1870
      %1872 = vmatmul.bf16.gmra.mxu0 %v1784
      %v1873 = vpop.f32.mrf.mxu0
      %v1874 = vadd.f32 0.0, %v1873
      %v1875 = vpop.f32.mrf.mxu0
      %v1876 = vadd.f32 0.0, %v1875
      %1877 = vdwg.mxu0
      %v1878 = vadd.f32 %v1748, %v1799
      %v1879 = vadd.f32 %v1749, %v1801
      %v1880 = vadd.f32 %v1750, %v1804
      %v1881 = vadd.f32 %v1751, %v1806
      %v1882 = vadd.f32 %v1752, %v1809
      %v1883 = vadd.f32 %v1753, %v1811
      %v1884 = vadd.f32 %v1754, %v1814
      %v1885 = vadd.f32 %v1755, %v1816
      %v1886 = vadd.f32 %v1756, %v1819
      %v1887 = vadd.f32 %v1757, %v1821
      %v1888 = vadd.f32 %v1758, %v1824
      %v1889 = vadd.f32 %v1759, %v1826
      %v1890 = vadd.f32 %v1760, %v1829
      %v1891 = vadd.f32 %v1761, %v1831
      %v1892 = vadd.f32 %v1762, %v1834
      %v1893 = vadd.f32 %v1763, %v1836
      %v1894 = vadd.f32 %v1764, %v1839
      %v1895 = vadd.f32 %v1765, %v1841
      %v1896 = vadd.f32 %v1766, %v1844
      %v1897 = vadd.f32 %v1767, %v1846
      %v1898 = vadd.f32 %v1768, %v1849
      %v1899 = vadd.f32 %v1769, %v1851
      %v1900 = vadd.f32 %v1770, %v1854
      %v1901 = vadd.f32 %v1771, %v1856
      %v1902 = vadd.f32 %v1772, %v1859
      %v1903 = vadd.f32 %v1773, %v1861
      %v1904 = vadd.f32 %v1774, %v1864
      %v1905 = vadd.f32 %v1775, %v1866
      %v1906 = vadd.f32 %v1776, %v1869
      %v1907 = vadd.f32 %v1777, %v1871
      %v1908 = vadd.f32 %v1778, %v1874
      %v1909 = vadd.f32 %v1779, %v1876
      %v1910 = vpack.c.bf16 %v605, %v604
      %s1911 = scalar_lea.vmem %s3, 8
      %v1912 = vld [vmem:[%s1911] sm:$0x3]
      %v1914 = vsel %vm1315, %v1910, 0
      %v1917 = vsel %vm1364, %v1912, 0
      %1919 = vmatpush.bf16.msra.mxu0 0
      %1920 = vmatpush.bf16.msra.mxu0 0
      %1921 = vmatpush.bf16.msra.mxu0 0
      %1922 = vmatpush.bf16.msra.mxu0 0
      %1923 = vmatpush.bf16.msra.mxu0 0
      %1924 = vmatpush.bf16.msra.mxu0 0
      %1925 = vmatpush.bf16.msra.mxu0 0
      %1926 = vmatpush.bf16.msra.mxu0 %v1917
      %1927 = vmatmul.bf16.gmra.mxu0 %v1320
      %v1928 = vpop.f32.mrf.mxu0
      %v1929 = vadd.f32 0.0, %v1928
      %v1930 = vpop.f32.mrf.mxu0
      %v1931 = vadd.f32 0.0, %v1930
      %1932 = vmatmul.bf16.gmra.mxu0 %v1323
      %v1933 = vpop.f32.mrf.mxu0
      %v1934 = vadd.f32 0.0, %v1933
      %v1935 = vpop.f32.mrf.mxu0
      %v1936 = vadd.f32 0.0, %v1935
      %1937 = vmatmul.bf16.gmra.mxu0 %v1326
      %v1938 = vpop.f32.mrf.mxu0
      %v1939 = vadd.f32 0.0, %v1938
      %v1940 = vpop.f32.mrf.mxu0
      %v1941 = vadd.f32 0.0, %v1940
      %1942 = vmatmul.bf16.gmra.mxu0 %v1329
      %v1943 = vpop.f32.mrf.mxu0
      %v1944 = vadd.f32 0.0, %v1943
      %v1945 = vpop.f32.mrf.mxu0
      %v1946 = vadd.f32 0.0, %v1945
      %1947 = vmatmul.bf16.gmra.mxu0 %v1332
      %v1948 = vpop.f32.mrf.mxu0
      %v1949 = vadd.f32 0.0, %v1948
      %v1950 = vpop.f32.mrf.mxu0
      %v1951 = vadd.f32 0.0, %v1950
      %1952 = vmatmul.bf16.gmra.mxu0 %v1335
      %v1953 = vpop.f32.mrf.mxu0
      %v1954 = vadd.f32 0.0, %v1953
      %v1955 = vpop.f32.mrf.mxu0
      %v1956 = vadd.f32 0.0, %v1955
      %1957 = vmatmul.bf16.gmra.mxu0 %v1338
      %v1958 = vpop.f32.mrf.mxu0
      %v1959 = vadd.f32 0.0, %v1958
      %v1960 = vpop.f32.mrf.mxu0
      %v1961 = vadd.f32 0.0, %v1960
      %1962 = vmatmul.bf16.gmra.mxu0 %v1341
      %v1963 = vpop.f32.mrf.mxu0
      %v1964 = vadd.f32 0.0, %v1963
      %v1965 = vpop.f32.mrf.mxu0
      %v1966 = vadd.f32 0.0, %v1965
      %1967 = vmatmul.bf16.gmra.mxu0 %v1344
      %v1968 = vpop.f32.mrf.mxu0
      %v1969 = vadd.f32 0.0, %v1968
      %v1970 = vpop.f32.mrf.mxu0
      %v1971 = vadd.f32 0.0, %v1970
      %1972 = vmatmul.bf16.gmra.mxu0 %v1347
      %v1973 = vpop.f32.mrf.mxu0
      %v1974 = vadd.f32 0.0, %v1973
      %v1975 = vpop.f32.mrf.mxu0
      %v1976 = vadd.f32 0.0, %v1975
      %1977 = vmatmul.bf16.gmra.mxu0 %v1350
      %v1978 = vpop.f32.mrf.mxu0
      %v1979 = vadd.f32 0.0, %v1978
      %v1980 = vpop.f32.mrf.mxu0
      %v1981 = vadd.f32 0.0, %v1980
      %1982 = vmatmul.bf16.gmra.mxu0 %v1353
      %v1983 = vpop.f32.mrf.mxu0
      %v1984 = vadd.f32 0.0, %v1983
      %v1985 = vpop.f32.mrf.mxu0
      %v1986 = vadd.f32 0.0, %v1985
      %1987 = vmatmul.bf16.gmra.mxu0 %v1356
      %v1988 = vpop.f32.mrf.mxu0
      %v1989 = vadd.f32 0.0, %v1988
      %v1990 = vpop.f32.mrf.mxu0
      %v1991 = vadd.f32 0.0, %v1990
      %1992 = vmatmul.bf16.gmra.mxu0 %v1359
      %v1993 = vpop.f32.mrf.mxu0
      %v1994 = vadd.f32 0.0, %v1993
      %v1995 = vpop.f32.mrf.mxu0
      %v1996 = vadd.f32 0.0, %v1995
      %1997 = vmatmul.bf16.gmra.mxu0 %v1362
      %v1998 = vpop.f32.mrf.mxu0
      %v1999 = vadd.f32 0.0, %v1998
      %v2000 = vpop.f32.mrf.mxu0
      %v2001 = vadd.f32 0.0, %v2000
      %2002 = vmatmul.bf16.gmra.mxu0 %v1914
      %v2003 = vpop.f32.mrf.mxu0
      %v2004 = vadd.f32 0.0, %v2003
      %v2005 = vpop.f32.mrf.mxu0
      %v2006 = vadd.f32 0.0, %v2005
      %2007 = vdwg.mxu0
      %v2008 = vadd.f32 %v1878, %v1929
      %v2009 = vadd.f32 %v1879, %v1931
      %v2010 = vadd.f32 %v1880, %v1934
      %v2011 = vadd.f32 %v1881, %v1936
      %v2012 = vadd.f32 %v1882, %v1939
      %v2013 = vadd.f32 %v1883, %v1941
      %v2014 = vadd.f32 %v1884, %v1944
      %v2015 = vadd.f32 %v1885, %v1946
      %v2016 = vadd.f32 %v1886, %v1949
      %v2017 = vadd.f32 %v1887, %v1951
      %v2018 = vadd.f32 %v1888, %v1954
      %v2019 = vadd.f32 %v1889, %v1956
      %v2020 = vadd.f32 %v1890, %v1959
      %v2021 = vadd.f32 %v1891, %v1961
      %v2022 = vadd.f32 %v1892, %v1964
      %v2023 = vadd.f32 %v1893, %v1966
      %v2024 = vadd.f32 %v1894, %v1969
      %v2025 = vadd.f32 %v1895, %v1971
      %v2026 = vadd.f32 %v1896, %v1974
      %v2027 = vadd.f32 %v1897, %v1976
      %v2028 = vadd.f32 %v1898, %v1979
      %v2029 = vadd.f32 %v1899, %v1981
      %v2030 = vadd.f32 %v1900, %v1984
      %v2031 = vadd.f32 %v1901, %v1986
      %v2032 = vadd.f32 %v1902, %v1989
      %v2033 = vadd.f32 %v1903, %v1991
      %v2034 = vadd.f32 %v1904, %v1994
      %v2035 = vadd.f32 %v1905, %v1996
      %v2036 = vadd.f32 %v1906, %v1999
      %v2037 = vadd.f32 %v1907, %v2001
      %v2038 = vadd.f32 %v1908, %v2004
      %v2039 = vadd.f32 %v1909, %v2006
      %v2040 = vpack.c.bf16 %v1280, %v1279
      %s2041 = scalar_lea.vmem %s3, 10
      %v2042 = vld [vmem:[%s2041] sm:$0x3]
      %v2044 = vsel %vm1315, %v2040, 0
      %v2047 = vsel %vm1364, %v2042, 0
      %2049 = vmatpush.bf16.msra.mxu0 0
      %2050 = vmatpush.bf16.msra.mxu0 0
      %2051 = vmatpush.bf16.msra.mxu0 0
      %2052 = vmatpush.bf16.msra.mxu0 0
      %2053 = vmatpush.bf16.msra.mxu0 0
      %2054 = vmatpush.bf16.msra.mxu0 0
      %2055 = vmatpush.bf16.msra.mxu0 0
      %2056 = vmatpush.bf16.msra.mxu0 %v2047
      %2057 = vmatmul.bf16.gmra.mxu0 %v1612
      %v2058 = vpop.f32.mrf.mxu0
      %v2059 = vadd.f32 0.0, %v2058
      %v2060 = vpop.f32.mrf.mxu0
      %v2061 = vadd.f32 0.0, %v2060
      %2062 = vmatmul.bf16.gmra.mxu0 %v1615
      %v2063 = vpop.f32.mrf.mxu0
      %v2064 = vadd.f32 0.0, %v2063
      %v2065 = vpop.f32.mrf.mxu0
      %v2066 = vadd.f32 0.0, %v2065
      %2067 = vmatmul.bf16.gmra.mxu0 %v1618
      %v2068 = vpop.f32.mrf.mxu0
      %v2069 = vadd.f32 0.0, %v2068
      %v2070 = vpop.f32.mrf.mxu0
      %v2071 = vadd.f32 0.0, %v2070
      %2072 = vmatmul.bf16.gmra.mxu0 %v1621
      %v2073 = vpop.f32.mrf.mxu0
      %v2074 = vadd.f32 0.0, %v2073
      %v2075 = vpop.f32.mrf.mxu0
      %v2076 = vadd.f32 0.0, %v2075
      %2077 = vmatmul.bf16.gmra.mxu0 %v1624
      %v2078 = vpop.f32.mrf.mxu0
      %v2079 = vadd.f32 0.0, %v2078
      %v2080 = vpop.f32.mrf.mxu0
      %v2081 = vadd.f32 0.0, %v2080
      %2082 = vmatmul.bf16.gmra.mxu0 %v1627
      %v2083 = vpop.f32.mrf.mxu0
      %v2084 = vadd.f32 0.0, %v2083
      %v2085 = vpop.f32.mrf.mxu0
      %v2086 = vadd.f32 0.0, %v2085
      %2087 = vmatmul.bf16.gmra.mxu0 %v1630
      %v2088 = vpop.f32.mrf.mxu0
      %v2089 = vadd.f32 0.0, %v2088
      %v2090 = vpop.f32.mrf.mxu0
      %v2091 = vadd.f32 0.0, %v2090
      %2092 = vmatmul.bf16.gmra.mxu0 %v1633
      %v2093 = vpop.f32.mrf.mxu0
      %v2094 = vadd.f32 0.0, %v2093
      %v2095 = vpop.f32.mrf.mxu0
      %v2096 = vadd.f32 0.0, %v2095
      %2097 = vmatmul.bf16.gmra.mxu0 %v1636
      %v2098 = vpop.f32.mrf.mxu0
      %v2099 = vadd.f32 0.0, %v2098
      %v2100 = vpop.f32.mrf.mxu0
      %v2101 = vadd.f32 0.0, %v2100
      %2102 = vmatmul.bf16.gmra.mxu0 %v1639
      %v2103 = vpop.f32.mrf.mxu0
      %v2104 = vadd.f32 0.0, %v2103
      %v2105 = vpop.f32.mrf.mxu0
      %v2106 = vadd.f32 0.0, %v2105
      %2107 = vmatmul.bf16.gmra.mxu0 %v1642
      %v2108 = vpop.f32.mrf.mxu0
      %v2109 = vadd.f32 0.0, %v2108
      %v2110 = vpop.f32.mrf.mxu0
      %v2111 = vadd.f32 0.0, %v2110
      %2112 = vmatmul.bf16.gmra.mxu0 %v1645
      %v2113 = vpop.f32.mrf.mxu0
      %v2114 = vadd.f32 0.0, %v2113
      %v2115 = vpop.f32.mrf.mxu0
      %v2116 = vadd.f32 0.0, %v2115
      %2117 = vmatmul.bf16.gmra.mxu0 %v1648
      %v2118 = vpop.f32.mrf.mxu0
      %v2119 = vadd.f32 0.0, %v2118
      %v2120 = vpop.f32.mrf.mxu0
      %v2121 = vadd.f32 0.0, %v2120
      %2122 = vmatmul.bf16.gmra.mxu0 %v1651
      %v2123 = vpop.f32.mrf.mxu0
      %v2124 = vadd.f32 0.0, %v2123
      %v2125 = vpop.f32.mrf.mxu0
      %v2126 = vadd.f32 0.0, %v2125
      %2127 = vmatmul.bf16.gmra.mxu0 %v1654
      %v2128 = vpop.f32.mrf.mxu0
      %v2129 = vadd.f32 0.0, %v2128
      %v2130 = vpop.f32.mrf.mxu0
      %v2131 = vadd.f32 0.0, %v2130
      %2132 = vmatmul.bf16.gmra.mxu0 %v2044
      %v2133 = vpop.f32.mrf.mxu0
      %v2134 = vadd.f32 0.0, %v2133
      %v2135 = vpop.f32.mrf.mxu0
      %v2136 = vadd.f32 0.0, %v2135
      %2137 = vdwg.mxu0
      %v2138 = vadd.f32 %v2008, %v2059
      %v2139 = vadd.f32 %v2009, %v2061
      %v2140 = vadd.f32 %v2010, %v2064
      %v2141 = vadd.f32 %v2011, %v2066
      %v2142 = vadd.f32 %v2012, %v2069
      %v2143 = vadd.f32 %v2013, %v2071
      %v2144 = vadd.f32 %v2014, %v2074
      %v2145 = vadd.f32 %v2015, %v2076
      %v2146 = vadd.f32 %v2016, %v2079
      %v2147 = vadd.f32 %v2017, %v2081
      %v2148 = vadd.f32 %v2018, %v2084
      %v2149 = vadd.f32 %v2019, %v2086
      %v2150 = vadd.f32 %v2020, %v2089
      %v2151 = vadd.f32 %v2021, %v2091
      %v2152 = vadd.f32 %v2022, %v2094
      %v2153 = vadd.f32 %v2023, %v2096
      %v2154 = vadd.f32 %v2024, %v2099
      %v2155 = vadd.f32 %v2025, %v2101
      %v2156 = vadd.f32 %v2026, %v2104
      %v2157 = vadd.f32 %v2027, %v2106
      %v2158 = vadd.f32 %v2028, %v2109
      %v2159 = vadd.f32 %v2029, %v2111
      %v2160 = vadd.f32 %v2030, %v2114
      %v2161 = vadd.f32 %v2031, %v2116
      %v2162 = vadd.f32 %v2032, %v2119
      %v2163 = vadd.f32 %v2033, %v2121
      %v2164 = vadd.f32 %v2034, %v2124
      %v2165 = vadd.f32 %v2035, %v2126
      %v2166 = vadd.f32 %v2036, %v2129
      %v2167 = vadd.f32 %v2037, %v2131
      %v2168 = vadd.f32 %v2038, %v2134
      %v2169 = vadd.f32 %v2039, %v2136
      %s2170 = scalar_lea.vmem %s3, 12
      %v2171 = vld [vmem:[%s2170] sm:$0x3]
      %v2173 = vsel %vm1364, %v2171, 0
      %2175 = vmatpush.bf16.msra.mxu0 0
      %2176 = vmatpush.bf16.msra.mxu0 0
      %2177 = vmatpush.bf16.msra.mxu0 0
      %2178 = vmatpush.bf16.msra.mxu0 0
      %2179 = vmatpush.bf16.msra.mxu0 0
      %2180 = vmatpush.bf16.msra.mxu0 0
      %2181 = vmatpush.bf16.msra.mxu0 0
      %2182 = vmatpush.bf16.msra.mxu0 %v2173
      %2183 = vmatmul.bf16.gmra.mxu0 %v1461
      %v2184 = vpop.f32.mrf.mxu0
      %v2185 = vadd.f32 0.0, %v2184
      %v2186 = vpop.f32.mrf.mxu0
      %v2187 = vadd.f32 0.0, %v2186
      %2188 = vmatmul.bf16.gmra.mxu0 %v1464
      %v2189 = vpop.f32.mrf.mxu0
      %v2190 = vadd.f32 0.0, %v2189
      %v2191 = vpop.f32.mrf.mxu0
      %v2192 = vadd.f32 0.0, %v2191
      %2193 = vmatmul.bf16.gmra.mxu0 %v1467
      %v2194 = vpop.f32.mrf.mxu0
      %v2195 = vadd.f32 0.0, %v2194
      %v2196 = vpop.f32.mrf.mxu0
      %v2197 = vadd.f32 0.0, %v2196
      %2198 = vmatmul.bf16.gmra.mxu0 %v1470
      %v2199 = vpop.f32.mrf.mxu0
      %v2200 = vadd.f32 0.0, %v2199
      %v2201 = vpop.f32.mrf.mxu0
      %v2202 = vadd.f32 0.0, %v2201
      %2203 = vmatmul.bf16.gmra.mxu0 %v1473
      %v2204 = vpop.f32.mrf.mxu0
      %v2205 = vadd.f32 0.0, %v2204
      %v2206 = vpop.f32.mrf.mxu0
      %v2207 = vadd.f32 0.0, %v2206
      %2208 = vmatmul.bf16.gmra.mxu0 %v1476
      %v2209 = vpop.f32.mrf.mxu0
      %v2210 = vadd.f32 0.0, %v2209
      %v2211 = vpop.f32.mrf.mxu0
      %v2212 = vadd.f32 0.0, %v2211
      %2213 = vmatmul.bf16.gmra.mxu0 %v1479
      %v2214 = vpop.f32.mrf.mxu0
      %v2215 = vadd.f32 0.0, %v2214
      %v2216 = vpop.f32.mrf.mxu0
      %v2217 = vadd.f32 0.0, %v2216
      %2218 = vmatmul.bf16.gmra.mxu0 %v1482
      %v2219 = vpop.f32.mrf.mxu0
      %v2220 = vadd.f32 0.0, %v2219
      %v2221 = vpop.f32.mrf.mxu0
      %v2222 = vadd.f32 0.0, %v2221
      %2223 = vmatmul.bf16.gmra.mxu0 %v1485
      %v2224 = vpop.f32.mrf.mxu0
      %v2225 = vadd.f32 0.0, %v2224
      %v2226 = vpop.f32.mrf.mxu0
      %v2227 = vadd.f32 0.0, %v2226
      %2228 = vmatmul.bf16.gmra.mxu0 %v1488
      %v2229 = vpop.f32.mrf.mxu0
      %v2230 = vadd.f32 0.0, %v2229
      %v2231 = vpop.f32.mrf.mxu0
      %v2232 = vadd.f32 0.0, %v2231
      %2233 = vmatmul.bf16.gmra.mxu0 %v1491
      %v2234 = vpop.f32.mrf.mxu0
      %v2235 = vadd.f32 0.0, %v2234
      %v2236 = vpop.f32.mrf.mxu0
      %v2237 = vadd.f32 0.0, %v2236
      %2238 = vmatmul.bf16.gmra.mxu0 %v1494
      %v2239 = vpop.f32.mrf.mxu0
      %v2240 = vadd.f32 0.0, %v2239
      %v2241 = vpop.f32.mrf.mxu0
      %v2242 = vadd.f32 0.0, %v2241
      %2243 = vmatmul.bf16.gmra.mxu0 %v1497
      %v2244 = vpop.f32.mrf.mxu0
      %v2245 = vadd.f32 0.0, %v2244
      %v2246 = vpop.f32.mrf.mxu0
      %v2247 = vadd.f32 0.0, %v2246
      %2248 = vmatmul.bf16.gmra.mxu0 %v1500
      %v2249 = vpop.f32.mrf.mxu0
      %v2250 = vadd.f32 0.0, %v2249
      %v2251 = vpop.f32.mrf.mxu0
      %v2252 = vadd.f32 0.0, %v2251
      %2253 = vmatmul.bf16.gmra.mxu0 %v1784
      %v2254 = vpop.f32.mrf.mxu0
      %v2255 = vadd.f32 0.0, %v2254
      %v2256 = vpop.f32.mrf.mxu0
      %v2257 = vadd.f32 0.0, %v2256
      %2258 = vmatmul.bf16.gmra.mxu0 %v1317
      %v2259 = vpop.f32.mrf.mxu0
      %v2260 = vadd.f32 0.0, %v2259
      %v2261 = vpop.f32.mrf.mxu0
      %v2262 = vadd.f32 0.0, %v2261
      %2263 = vdwg.mxu0
      %v2264 = vadd.f32 %v2138, %v2185
      %v2265 = vadd.f32 %v2139, %v2187
      %v2266 = vadd.f32 %v2140, %v2190
      %v2267 = vadd.f32 %v2141, %v2192
      %v2268 = vadd.f32 %v2142, %v2195
      %v2269 = vadd.f32 %v2143, %v2197
      %v2270 = vadd.f32 %v2144, %v2200
      %v2271 = vadd.f32 %v2145, %v2202
      %v2272 = vadd.f32 %v2146, %v2205
      %v2273 = vadd.f32 %v2147, %v2207
      %v2274 = vadd.f32 %v2148, %v2210
      %v2275 = vadd.f32 %v2149, %v2212
      %v2276 = vadd.f32 %v2150, %v2215
      %v2277 = vadd.f32 %v2151, %v2217
      %v2278 = vadd.f32 %v2152, %v2220
      %v2279 = vadd.f32 %v2153, %v2222
      %v2280 = vadd.f32 %v2154, %v2225
      %v2281 = vadd.f32 %v2155, %v2227
      %v2282 = vadd.f32 %v2156, %v2230
      %v2283 = vadd.f32 %v2157, %v2232
      %v2284 = vadd.f32 %v2158, %v2235
      %v2285 = vadd.f32 %v2159, %v2237
      %v2286 = vadd.f32 %v2160, %v2240
      %v2287 = vadd.f32 %v2161, %v2242
      %v2288 = vadd.f32 %v2162, %v2245
      %v2289 = vadd.f32 %v2163, %v2247
      %v2290 = vadd.f32 %v2164, %v2250
      %v2291 = vadd.f32 %v2165, %v2252
      %v2292 = vadd.f32 %v2166, %v2255
      %v2293 = vadd.f32 %v2167, %v2257
      %v2294 = vadd.f32 %v2168, %v2260
      %v2295 = vadd.f32 %v2169, %v2262
      %s2296 = scalar_lea.vmem %s3, 14
      %v2297 = vld [vmem:[%s2296] sm:$0x3]
      %v2299 = vsel %vm1364, %v2297, 0
      %2301 = vmatpush.bf16.msra.mxu0 0
      %2302 = vmatpush.bf16.msra.mxu0 0
      %2303 = vmatpush.bf16.msra.mxu0 0
      %2304 = vmatpush.bf16.msra.mxu0 0
      %2305 = vmatpush.bf16.msra.mxu0 0
      %2306 = vmatpush.bf16.msra.mxu0 0
      %2307 = vmatpush.bf16.msra.mxu0 0
      %2308 = vmatpush.bf16.msra.mxu0 %v2299
      %2309 = vmatmul.bf16.gmra.mxu0 %v1323
      %v2310 = vpop.f32.mrf.mxu0
      %v2311 = vadd.f32 0.0, %v2310
      %v2312 = vpop.f32.mrf.mxu0
      %v2313 = vadd.f32 0.0, %v2312
      %2314 = vmatmul.bf16.gmra.mxu0 %v1326
      %v2315 = vpop.f32.mrf.mxu0
      %v2316 = vadd.f32 0.0, %v2315
      %v2317 = vpop.f32.mrf.mxu0
      %v2318 = vadd.f32 0.0, %v2317
      %2319 = vmatmul.bf16.gmra.mxu0 %v1329
      %v2320 = vpop.f32.mrf.mxu0
      %v2321 = vadd.f32 0.0, %v2320
      %v2322 = vpop.f32.mrf.mxu0
      %v2323 = vadd.f32 0.0, %v2322
      %2324 = vmatmul.bf16.gmra.mxu0 %v1332
      %v2325 = vpop.f32.mrf.mxu0
      %v2326 = vadd.f32 0.0, %v2325
      %v2327 = vpop.f32.mrf.mxu0
      %v2328 = vadd.f32 0.0, %v2327
      %2329 = vmatmul.bf16.gmra.mxu0 %v1335
      %v2330 = vpop.f32.mrf.mxu0
      %v2331 = vadd.f32 0.0, %v2330
      %v2332 = vpop.f32.mrf.mxu0
      %v2333 = vadd.f32 0.0, %v2332
      %2334 = vmatmul.bf16.gmra.mxu0 %v1338
      %v2335 = vpop.f32.mrf.mxu0
      %v2336 = vadd.f32 0.0, %v2335
      %v2337 = vpop.f32.mrf.mxu0
      %v2338 = vadd.f32 0.0, %v2337
      %2339 = vmatmul.bf16.gmra.mxu0 %v1341
      %v2340 = vpop.f32.mrf.mxu0
      %v2341 = vadd.f32 0.0, %v2340
      %v2342 = vpop.f32.mrf.mxu0
      %v2343 = vadd.f32 0.0, %v2342
      %2344 = vmatmul.bf16.gmra.mxu0 %v1344
      %v2345 = vpop.f32.mrf.mxu0
      %v2346 = vadd.f32 0.0, %v2345
      %v2347 = vpop.f32.mrf.mxu0
      %v2348 = vadd.f32 0.0, %v2347
      %2349 = vmatmul.bf16.gmra.mxu0 %v1347
      %v2350 = vpop.f32.mrf.mxu0
      %v2351 = vadd.f32 0.0, %v2350
      %v2352 = vpop.f32.mrf.mxu0
      %v2353 = vadd.f32 0.0, %v2352
      %2354 = vmatmul.bf16.gmra.mxu0 %v1350
      %v2355 = vpop.f32.mrf.mxu0
      %v2356 = vadd.f32 0.0, %v2355
      %v2357 = vpop.f32.mrf.mxu0
      %v2358 = vadd.f32 0.0, %v2357
      %2359 = vmatmul.bf16.gmra.mxu0 %v1353
      %v2360 = vpop.f32.mrf.mxu0
      %v2361 = vadd.f32 0.0, %v2360
      %v2362 = vpop.f32.mrf.mxu0
      %v2363 = vadd.f32 0.0, %v2362
      %2364 = vmatmul.bf16.gmra.mxu0 %v1356
      %v2365 = vpop.f32.mrf.mxu0
      %v2366 = vadd.f32 0.0, %v2365
      %v2367 = vpop.f32.mrf.mxu0
      %v2368 = vadd.f32 0.0, %v2367
      %2369 = vmatmul.bf16.gmra.mxu0 %v1359
      %v2370 = vpop.f32.mrf.mxu0
      %v2371 = vadd.f32 0.0, %v2370
      %v2372 = vpop.f32.mrf.mxu0
      %v2373 = vadd.f32 0.0, %v2372
      %2374 = vmatmul.bf16.gmra.mxu0 %v1362
      %v2375 = vpop.f32.mrf.mxu0
      %v2376 = vadd.f32 0.0, %v2375
      %v2377 = vpop.f32.mrf.mxu0
      %v2378 = vadd.f32 0.0, %v2377
      %2379 = vmatmul.bf16.gmra.mxu0 %v1914
      %v2380 = vpop.f32.mrf.mxu0
      %v2381 = vadd.f32 0.0, %v2380
      %v2382 = vpop.f32.mrf.mxu0
      %v2383 = vadd.f32 0.0, %v2382
      %2384 = vmatmul.bf16.gmra.mxu0 %v1317
      %v2385 = vpop.f32.mrf.mxu0
      %v2386 = vadd.f32 0.0, %v2385
      %v2387 = vpop.f32.mrf.mxu0
      %v2388 = vadd.f32 0.0, %v2387
      %2389 = vdwg.mxu0
      %v2390 = vadd.f32 %v2264, %v2311
      %v2391 = vadd.f32 %v2265, %v2313
      %v2392 = vadd.f32 %v2266, %v2316
      %v2393 = vadd.f32 %v2267, %v2318
      %v2394 = vadd.f32 %v2268, %v2321
      %v2395 = vadd.f32 %v2269, %v2323
      %v2396 = vadd.f32 %v2270, %v2326
      %v2397 = vadd.f32 %v2271, %v2328
      %v2398 = vadd.f32 %v2272, %v2331
      %v2399 = vadd.f32 %v2273, %v2333
      %v2400 = vadd.f32 %v2274, %v2336
      %v2401 = vadd.f32 %v2275, %v2338
      %v2402 = vadd.f32 %v2276, %v2341
      %v2403 = vadd.f32 %v2277, %v2343
      %v2404 = vadd.f32 %v2278, %v2346
      %v2405 = vadd.f32 %v2279, %v2348
      %v2406 = vadd.f32 %v2280, %v2351
      %v2407 = vadd.f32 %v2281, %v2353
      %v2408 = vadd.f32 %v2282, %v2356
      %v2409 = vadd.f32 %v2283, %v2358
      %v2410 = vadd.f32 %v2284, %v2361
      %v2411 = vadd.f32 %v2285, %v2363
      %v2412 = vadd.f32 %v2286, %v2366
      %v2413 = vadd.f32 %v2287, %v2368
      %v2414 = vadd.f32 %v2288, %v2371
      %v2415 = vadd.f32 %v2289, %v2373
      %v2416 = vadd.f32 %v2290, %v2376
      %v2417 = vadd.f32 %v2291, %v2378
      %v2418 = vadd.f32 %v2292, %v2381
      %v2419 = vadd.f32 %v2293, %v2383
      %v2420 = vadd.f32 %v2294, %v2386
      %v2421 = vadd.f32 %v2295, %v2388
      %s2422 = scalar_lea.vmem %s3, 16
      %v2423 = vld [vmem:[%s2422] sm:$0x3]
      %v2425 = vsel %vm1364, %v2423, 0
      %2427 = vmatpush.bf16.msra.mxu0 0
      %2428 = vmatpush.bf16.msra.mxu0 0
      %2429 = vmatpush.bf16.msra.mxu0 0
      %2430 = vmatpush.bf16.msra.mxu0 0
      %2431 = vmatpush.bf16.msra.mxu0 0
      %2432 = vmatpush.bf16.msra.mxu0 0
      %2433 = vmatpush.bf16.msra.mxu0 0
      %2434 = vmatpush.bf16.msra.mxu0 %v2425
      %2435 = vmatmul.bf16.gmra.mxu0 %v1615
      %v2436 = vpop.f32.mrf.mxu0
      %v2437 = vadd.f32 0.0, %v2436
      %v2438 = vpop.f32.mrf.mxu0
      %v2439 = vadd.f32 0.0, %v2438
      %2440 = vmatmul.bf16.gmra.mxu0 %v1618
      %v2441 = vpop.f32.mrf.mxu0
      %v2442 = vadd.f32 0.0, %v2441
      %v2443 = vpop.f32.mrf.mxu0
      %v2444 = vadd.f32 0.0, %v2443
      %2445 = vmatmul.bf16.gmra.mxu0 %v1621
      %v2446 = vpop.f32.mrf.mxu0
      %v2447 = vadd.f32 0.0, %v2446
      %v2448 = vpop.f32.mrf.mxu0
      %v2449 = vadd.f32 0.0, %v2448
      %2450 = vmatmul.bf16.gmra.mxu0 %v1624
      %v2451 = vpop.f32.mrf.mxu0
      %v2452 = vadd.f32 0.0, %v2451
      %v2453 = vpop.f32.mrf.mxu0
      %v2454 = vadd.f32 0.0, %v2453
      %2455 = vmatmul.bf16.gmra.mxu0 %v1627
      %v2456 = vpop.f32.mrf.mxu0
      %v2457 = vadd.f32 0.0, %v2456
      %v2458 = vpop.f32.mrf.mxu0
      %v2459 = vadd.f32 0.0, %v2458
      %2460 = vmatmul.bf16.gmra.mxu0 %v1630
      %v2461 = vpop.f32.mrf.mxu0
      %v2462 = vadd.f32 0.0, %v2461
      %v2463 = vpop.f32.mrf.mxu0
      %v2464 = vadd.f32 0.0, %v2463
      %2465 = vmatmul.bf16.gmra.mxu0 %v1633
      %v2466 = vpop.f32.mrf.mxu0
      %v2467 = vadd.f32 0.0, %v2466
      %v2468 = vpop.f32.mrf.mxu0
      %v2469 = vadd.f32 0.0, %v2468
      %2470 = vmatmul.bf16.gmra.mxu0 %v1636
      %v2471 = vpop.f32.mrf.mxu0
      %v2472 = vadd.f32 0.0, %v2471
      %v2473 = vpop.f32.mrf.mxu0
      %v2474 = vadd.f32 0.0, %v2473
      %2475 = vmatmul.bf16.gmra.mxu0 %v1639
      %v2476 = vpop.f32.mrf.mxu0
      %v2477 = vadd.f32 0.0, %v2476
      %v2478 = vpop.f32.mrf.mxu0
      %v2479 = vadd.f32 0.0, %v2478
      %2480 = vmatmul.bf16.gmra.mxu0 %v1642
      %v2481 = vpop.f32.mrf.mxu0
      %v2482 = vadd.f32 0.0, %v2481
      %v2483 = vpop.f32.mrf.mxu0
      %v2484 = vadd.f32 0.0, %v2483
      %2485 = vmatmul.bf16.gmra.mxu0 %v1645
      %v2486 = vpop.f32.mrf.mxu0
      %v2487 = vadd.f32 0.0, %v2486
      %v2488 = vpop.f32.mrf.mxu0
      %v2489 = vadd.f32 0.0, %v2488
      %2490 = vmatmul.bf16.gmra.mxu0 %v1648
      %v2491 = vpop.f32.mrf.mxu0
      %v2492 = vadd.f32 0.0, %v2491
      %v2493 = vpop.f32.mrf.mxu0
      %v2494 = vadd.f32 0.0, %v2493
      %2495 = vmatmul.bf16.gmra.mxu0 %v1651
      %v2496 = vpop.f32.mrf.mxu0
      %v2497 = vadd.f32 0.0, %v2496
      %v2498 = vpop.f32.mrf.mxu0
      %v2499 = vadd.f32 0.0, %v2498
      %2500 = vmatmul.bf16.gmra.mxu0 %v1654
      %v2501 = vpop.f32.mrf.mxu0
      %v2502 = vadd.f32 0.0, %v2501
      %v2503 = vpop.f32.mrf.mxu0
      %v2504 = vadd.f32 0.0, %v2503
      %2505 = vmatmul.bf16.gmra.mxu0 %v2044
      %v2506 = vpop.f32.mrf.mxu0
      %v2507 = vadd.f32 0.0, %v2506
      %v2508 = vpop.f32.mrf.mxu0
      %v2509 = vadd.f32 0.0, %v2508
      %2510 = vmatmul.bf16.gmra.mxu0 %v1317
      %v2511 = vpop.f32.mrf.mxu0
      %v2512 = vadd.f32 0.0, %v2511
      %v2513 = vpop.f32.mrf.mxu0
      %v2514 = vadd.f32 0.0, %v2513
      %2515 = vdwg.mxu0
      %v2516 = vadd.f32 %v2390, %v2437
      %v2517 = vadd.f32 %v2391, %v2439
      %v2518 = vadd.f32 %v2392, %v2442
      %v2519 = vadd.f32 %v2393, %v2444
      %v2520 = vadd.f32 %v2394, %v2447
      %v2521 = vadd.f32 %v2395, %v2449
      %v2522 = vadd.f32 %v2396, %v2452
      %v2523 = vadd.f32 %v2397, %v2454
      %v2524 = vadd.f32 %v2398, %v2457
      %v2525 = vadd.f32 %v2399, %v2459
      %v2526 = vadd.f32 %v2400, %v2462
      %v2527 = vadd.f32 %v2401, %v2464
      %v2528 = vadd.f32 %v2402, %v2467
      %v2529 = vadd.f32 %v2403, %v2469
      %v2530 = vadd.f32 %v2404, %v2472
      %v2531 = vadd.f32 %v2405, %v2474
      %v2532 = vadd.f32 %v2406, %v2477
      %v2533 = vadd.f32 %v2407, %v2479
      %v2534 = vadd.f32 %v2408, %v2482
      %v2535 = vadd.f32 %v2409, %v2484
      %v2536 = vadd.f32 %v2410, %v2487
      %v2537 = vadd.f32 %v2411, %v2489
      %v2538 = vadd.f32 %v2412, %v2492
      %v2539 = vadd.f32 %v2413, %v2494
      %v2540 = vadd.f32 %v2414, %v2497
      %v2541 = vadd.f32 %v2415, %v2499
      %v2542 = vadd.f32 %v2416, %v2502
      %v2543 = vadd.f32 %v2417, %v2504
      %v2544 = vadd.f32 %v2418, %v2507
      %v2545 = vadd.f32 %v2419, %v2509
      %v2546 = vadd.f32 %v2420, %v2512
      %v2547 = vadd.f32 %v2421, %v2514
      %v2548 = vld [vmem:[%s4] sm:$0x1]
      %v2550 = vperm.slane %v2548, 0
      %v2552 = vadd.f32 %v2516, %v2550
      %v2553 = vadd.f32 %v2517, %v2550
      %v2554 = vadd.f32 %v2518, %v2550
      %v2555 = vadd.f32 %v2519, %v2550
      %v2556 = vadd.f32 %v2520, %v2550
      %v2557 = vadd.f32 %v2521, %v2550
      %v2558 = vadd.f32 %v2522, %v2550
      %v2559 = vadd.f32 %v2523, %v2550
      %v2560 = vadd.f32 %v2524, %v2550
      %v2561 = vadd.f32 %v2525, %v2550
      %v2562 = vadd.f32 %v2526, %v2550
      %v2563 = vadd.f32 %v2527, %v2550
      %v2564 = vadd.f32 %v2528, %v2550
      %v2565 = vadd.f32 %v2529, %v2550
      %v2566 = vadd.f32 %v2530, %v2550
      %v2567 = vadd.f32 %v2531, %v2550
      %v2568 = vadd.f32 %v2532, %v2550
      %v2569 = vadd.f32 %v2533, %v2550
      %v2570 = vadd.f32 %v2534, %v2550
      %v2571 = vadd.f32 %v2535, %v2550
      %v2572 = vadd.f32 %v2536, %v2550
      %v2573 = vadd.f32 %v2537, %v2550
      %v2574 = vadd.f32 %v2538, %v2550
      %v2575 = vadd.f32 %v2539, %v2550
      %v2576 = vadd.f32 %v2540, %v2550
      %v2577 = vadd.f32 %v2541, %v2550
      %v2578 = vadd.f32 %v2542, %v2550
      %v2579 = vadd.f32 %v2543, %v2550
      %v2580 = vadd.f32 %v2544, %v2550
      %v2581 = vadd.f32 %v2545, %v2550
      %v2582 = vadd.f32 %v2546, %v2550
      %v2583 = vadd.f32 %v2547, %v2550
      %v2584 = vmax.f32 %v2552, 0.0
      %v2585 = vmax.f32 %v2553, 0.0
      %v2586 = vmax.f32 %v2554, 0.0
      %v2587 = vmax.f32 %v2555, 0.0
      %v2588 = vmax.f32 %v2556, 0.0
      %v2589 = vmax.f32 %v2557, 0.0
      %v2590 = vmax.f32 %v2558, 0.0
      %v2591 = vmax.f32 %v2559, 0.0
      %v2592 = vmax.f32 %v2560, 0.0
      %v2593 = vmax.f32 %v2561, 0.0
      %v2594 = vmax.f32 %v2562, 0.0
      %v2595 = vmax.f32 %v2563, 0.0
      %v2596 = vmax.f32 %v2564, 0.0
      %v2597 = vmax.f32 %v2565, 0.0
      %v2598 = vmax.f32 %v2566, 0.0
      %v2599 = vmax.f32 %v2567, 0.0
      %v2600 = vmax.f32 %v2568, 0.0
      %v2601 = vmax.f32 %v2569, 0.0
      %v2602 = vmax.f32 %v2570, 0.0
      %v2603 = vmax.f32 %v2571, 0.0
      %v2604 = vmax.f32 %v2572, 0.0
      %v2605 = vmax.f32 %v2573, 0.0
      %v2606 = vmax.f32 %v2574, 0.0
      %v2607 = vmax.f32 %v2575, 0.0
      %v2608 = vmax.f32 %v2576, 0.0
      %v2609 = vmax.f32 %v2577, 0.0
      %v2610 = vmax.f32 %v2578, 0.0
      %v2611 = vmax.f32 %v2579, 0.0
      %v2612 = vmax.f32 %v2580, 0.0
      %v2613 = vmax.f32 %v2581, 0.0
      %v2614 = vmax.f32 %v2582, 0.0
      %v2615 = vmax.f32 %v2583, 0.0
      %v2616 = vpack.c.bf16 %v2585, %v2584
      %v2617 = vpack.c.bf16 %v2587, %v2586
      %v2618 = vpack.c.bf16 %v2589, %v2588
      %v2619 = vpack.c.bf16 %v2591, %v2590
      %v2620 = vpack.c.bf16 %v2593, %v2592
      %v2621 = vpack.c.bf16 %v2595, %v2594
      %v2622 = vpack.c.bf16 %v2597, %v2596
      %v2623 = vpack.c.bf16 %v2599, %v2598
      %v2624 = vpack.c.bf16 %v2601, %v2600
      %v2625 = vpack.c.bf16 %v2603, %v2602
      %v2626 = vpack.c.bf16 %v2605, %v2604
      %v2627 = vpack.c.bf16 %v2607, %v2606
      %v2628 = vpack.c.bf16 %v2609, %v2608
      %v2629 = vpack.c.bf16 %v2611, %v2610
      %v2630 = vpack.c.bf16 %v2613, %v2612
      %v2631 = vpack.c.bf16 %v2615, %v2614
      %v2632 = vld [vmem:[%s5] sm:$0x3]
      %v2633 = vld [vmem:[%s6] sm:$0x1]
      %v2635 = vperm.slane %v2633, 0
      %v2638 = vsel %vm1315, %v2616, 0
      %v2641 = vsel %vm1315, %v2617, 0
      %v2644 = vsel %vm1315, %v2618, 0
      %v2647 = vsel %vm1315, %v2619, 0
      %v2650 = vsel %vm1315, %v2620, 0
      %v2653 = vsel %vm1315, %v2621, 0
      %v2656 = vsel %vm1315, %v2622, 0
      %v2659 = vsel %vm1315, %v2623, 0
      %v2662 = vsel %vm1315, %v2624, 0
      %v2665 = vsel %vm1315, %v2625, 0
      %v2668 = vsel %vm1315, %v2626, 0
      %v2671 = vsel %vm1315, %v2627, 0
      %v2674 = vsel %vm1315, %v2628, 0
      %v2677 = vsel %vm1315, %v2629, 0
      %v2680 = vsel %vm1315, %v2630, 0
      %v2683 = vsel %vm1315, %v2631, 0
      %v2686 = vsel %vm1364, %v2632, 0
      %2688 = vmatpush.bf16.msra.mxu0 0
      %2689 = vmatpush.bf16.msra.mxu0 0
      %2690 = vmatpush.bf16.msra.mxu0 0
      %2691 = vmatpush.bf16.msra.mxu0 0
      %2692 = vmatpush.bf16.msra.mxu0 0
      %2693 = vmatpush.bf16.msra.mxu0 0
      %2694 = vmatpush.bf16.msra.mxu0 0
      %2695 = vmatpush.bf16.msra.mxu0 %v2686
      %2696 = vmatmul.bf16.gmra.mxu0 %v2638
      %v2697 = vpop.f32.mrf.mxu0
      %v2698 = vadd.f32 %v2635, %v2697
      %v2699 = vpop.f32.mrf.mxu0
      %v2700 = vadd.f32 %v2635, %v2699
      %2701 = vmatmul.bf16.gmra.mxu0 %v2641
      %v2702 = vpop.f32.mrf.mxu0
      %v2703 = vadd.f32 %v2635, %v2702
      %v2704 = vpop.f32.mrf.mxu0
      %v2705 = vadd.f32 %v2635, %v2704
      %2706 = vmatmul.bf16.gmra.mxu0 %v2644
      %v2707 = vpop.f32.mrf.mxu0
      %v2708 = vadd.f32 %v2635, %v2707
      %v2709 = vpop.f32.mrf.mxu0
      %v2710 = vadd.f32 %v2635, %v2709
      %2711 = vmatmul.bf16.gmra.mxu0 %v2647
      %v2712 = vpop.f32.mrf.mxu0
      %v2713 = vadd.f32 %v2635, %v2712
      %v2714 = vpop.f32.mrf.mxu0
      %v2715 = vadd.f32 %v2635, %v2714
      %2716 = vmatmul.bf16.gmra.mxu0 %v2650
      %v2717 = vpop.f32.mrf.mxu0
      %v2718 = vadd.f32 %v2635, %v2717
      %v2719 = vpop.f32.mrf.mxu0
      %v2720 = vadd.f32 %v2635, %v2719
      %2721 = vmatmul.bf16.gmra.mxu0 %v2653
      %v2722 = vpop.f32.mrf.mxu0
      %v2723 = vadd.f32 %v2635, %v2722
      %v2724 = vpop.f32.mrf.mxu0
      %v2725 = vadd.f32 %v2635, %v2724
      %2726 = vmatmul.bf16.gmra.mxu0 %v2656
      %v2727 = vpop.f32.mrf.mxu0
      %v2728 = vadd.f32 %v2635, %v2727
      %v2729 = vpop.f32.mrf.mxu0
      %v2730 = vadd.f32 %v2635, %v2729
      %2731 = vmatmul.bf16.gmra.mxu0 %v2659
      %v2732 = vpop.f32.mrf.mxu0
      %v2733 = vadd.f32 %v2635, %v2732
      %v2734 = vpop.f32.mrf.mxu0
      %v2735 = vadd.f32 %v2635, %v2734
      %2736 = vmatmul.bf16.gmra.mxu0 %v2662
      %v2737 = vpop.f32.mrf.mxu0
      %v2738 = vadd.f32 %v2635, %v2737
      %v2739 = vpop.f32.mrf.mxu0
      %v2740 = vadd.f32 %v2635, %v2739
      %2741 = vmatmul.bf16.gmra.mxu0 %v2665
      %v2742 = vpop.f32.mrf.mxu0
      %v2743 = vadd.f32 %v2635, %v2742
      %v2744 = vpop.f32.mrf.mxu0
      %v2745 = vadd.f32 %v2635, %v2744
      %2746 = vmatmul.bf16.gmra.mxu0 %v2668
      %v2747 = vpop.f32.mrf.mxu0
      %v2748 = vadd.f32 %v2635, %v2747
      %v2749 = vpop.f32.mrf.mxu0
      %v2750 = vadd.f32 %v2635, %v2749
      %2751 = vmatmul.bf16.gmra.mxu0 %v2671
      %v2752 = vpop.f32.mrf.mxu0
      %v2753 = vadd.f32 %v2635, %v2752
      %v2754 = vpop.f32.mrf.mxu0
      %v2755 = vadd.f32 %v2635, %v2754
      %2756 = vmatmul.bf16.gmra.mxu0 %v2674
      %v2757 = vpop.f32.mrf.mxu0
      %v2758 = vadd.f32 %v2635, %v2757
      %v2759 = vpop.f32.mrf.mxu0
      %v2760 = vadd.f32 %v2635, %v2759
      %2761 = vmatmul.bf16.gmra.mxu0 %v2677
      %v2762 = vpop.f32.mrf.mxu0
      %v2763 = vadd.f32 %v2635, %v2762
      %v2764 = vpop.f32.mrf.mxu0
      %v2765 = vadd.f32 %v2635, %v2764
      %2766 = vmatmul.bf16.gmra.mxu0 %v2680
      %v2767 = vpop.f32.mrf.mxu0
      %v2768 = vadd.f32 %v2635, %v2767
      %v2769 = vpop.f32.mrf.mxu0
      %v2770 = vadd.f32 %v2635, %v2769
      %2771 = vmatmul.bf16.gmra.mxu0 %v2683
      %v2772 = vpop.f32.mrf.mxu0
      %v2773 = vadd.f32 %v2635, %v2772
      %v2774 = vpop.f32.mrf.mxu0
      %v2775 = vadd.f32 %v2635, %v2774
      %2776 = vdwg.mxu0
      %v2777 = vadd.f32 %v2698, %v312
      %v2778 = vadd.f32 %v2700, %v313
      %v2779 = vadd.f32 %v2703, %v314
      %v2780 = vadd.f32 %v2705, %v315
      %v2781 = vadd.f32 %v2708, %v316
      %v2782 = vadd.f32 %v2710, %v317
      %v2783 = vadd.f32 %v2713, %v318
      %v2784 = vadd.f32 %v2715, %v319
      %v2785 = vadd.f32 %v2718, %v320
      %v2786 = vadd.f32 %v2720, %v321
      %v2787 = vadd.f32 %v2723, %v322
      %v2788 = vadd.f32 %v2725, %v323
      %v2789 = vadd.f32 %v2728, %v324
      %v2790 = vadd.f32 %v2730, %v325
      %v2791 = vadd.f32 %v2733, %v326
      %v2792 = vadd.f32 %v2735, %v327
      %v2793 = vadd.f32 %v2738, %v328
      %v2794 = vadd.f32 %v2740, %v329
      %v2795 = vadd.f32 %v2743, %v330
      %v2796 = vadd.f32 %v2745, %v331
      %v2797 = vadd.f32 %v2748, %v332
      %v2798 = vadd.f32 %v2750, %v333
      %v2799 = vadd.f32 %v2753, %v334
      %v2800 = vadd.f32 %v2755, %v335
      %v2801 = vadd.f32 %v2758, %v336
      %v2802 = vadd.f32 %v2760, %v337
      %v2803 = vadd.f32 %v2763, %v338
      %v2804 = vadd.f32 %v2765, %v339
      %v2805 = vadd.f32 %v2768, %v340
      %v2806 = vadd.f32 %v2770, %v341
      %v2807 = vadd.f32 %v2773, %v342
      %v2808 = vadd.f32 %v2775, %v343
      %v2809 = vmax.f32 %v2777, 0.0
      %v2810 = vmax.f32 %v2778, 0.0
      %v2811 = vmax.f32 %v2779, 0.0
      %v2812 = vmax.f32 %v2780, 0.0
      %v2813 = vmax.f32 %v2781, 0.0
      %v2814 = vmax.f32 %v2782, 0.0
      %v2815 = vmax.f32 %v2783, 0.0
      %v2816 = vmax.f32 %v2784, 0.0
      %v2817 = vmax.f32 %v2785, 0.0
      %v2818 = vmax.f32 %v2786, 0.0
      %v2819 = vmax.f32 %v2787, 0.0
      %v2820 = vmax.f32 %v2788, 0.0
      %v2821 = vmax.f32 %v2789, 0.0
      %v2822 = vmax.f32 %v2790, 0.0
      %v2823 = vmax.f32 %v2791, 0.0
      %v2824 = vmax.f32 %v2792, 0.0
      %v2825 = vmax.f32 %v2793, 0.0
      %v2826 = vmax.f32 %v2794, 0.0
      %v2827 = vmax.f32 %v2795, 0.0
      %v2828 = vmax.f32 %v2796, 0.0
      %v2829 = vmax.f32 %v2797, 0.0
      %v2830 = vmax.f32 %v2798, 0.0
      %v2831 = vmax.f32 %v2799, 0.0
      %v2832 = vmax.f32 %v2800, 0.0
      %v2833 = vmax.f32 %v2801, 0.0
      %v2834 = vmax.f32 %v2802, 0.0
      %v2835 = vmax.f32 %v2803, 0.0
      %v2836 = vmax.f32 %v2804, 0.0
      %v2837 = vmax.f32 %v2805, 0.0
      %v2838 = vmax.f32 %v2806, 0.0
      %v2839 = vmax.f32 %v2807, 0.0
      %v2840 = vmax.f32 %v2808, 0.0
      %2841 = vst.msk [vmem:[%s278] sm:$0xff] %vm436, %v2809
      %2842 = vst.msk [vmem:[%s278 + $0x8] sm:$0xff] %vm436, %v2810
      %2843 = vst.msk [vmem:[%s278 + $0x10] sm:$0xff] %vm436, %v2811
      %2844 = vst.msk [vmem:[%s278 + $0x18] sm:$0xff] %vm436, %v2812
      %2845 = vst.msk [vmem:[%s278 + $0x20] sm:$0xff] %vm436, %v2813
      %2846 = vst.msk [vmem:[%s278 + $0x28] sm:$0xff] %vm436, %v2814
      %2847 = vst.msk [vmem:[%s278 + $0x30] sm:$0xff] %vm436, %v2815
      %2848 = vst.msk [vmem:[%s278 + $0x38] sm:$0xff] %vm436, %v2816
      %2849 = vst.msk [vmem:[%s278 + $0x40] sm:$0xff] %vm436, %v2817
      %2850 = vst.msk [vmem:[%s278 + $0x48] sm:$0xff] %vm436, %v2818
      %2851 = vst.msk [vmem:[%s278 + $0x50] sm:$0xff] %vm436, %v2819
      %2852 = vst.msk [vmem:[%s278 + $0x58] sm:$0xff] %vm436, %v2820
      %2853 = vst.msk [vmem:[%s278 + $0x60] sm:$0xff] %vm436, %v2821
      %2854 = vst.msk [vmem:[%s278 + $0x68] sm:$0xff] %vm436, %v2822
      %2855 = vst.msk [vmem:[%s278 + $0x70] sm:$0xff] %vm436, %v2823
      %2856 = vst.msk [vmem:[%s278 + $0x78] sm:$0xff] %vm436, %v2824
      %2857 = vst.msk [vmem:[%s278 + $0x80] sm:$0xff] %vm436, %v2825
      %2858 = vst.msk [vmem:[%s278 + $0x88] sm:$0xff] %vm436, %v2826
      %2859 = vst.msk [vmem:[%s278 + $0x90] sm:$0xff] %vm436, %v2827
      %2860 = vst.msk [vmem:[%s278 + $0x98] sm:$0xff] %vm436, %v2828
      %2861 = vst.msk [vmem:[%s278 + $0xa0] sm:$0xff] %vm436, %v2829
      %2862 = vst.msk [vmem:[%s278 + $0xa8] sm:$0xff] %vm436, %v2830
      %2863 = vst.msk [vmem:[%s278 + $0xb0] sm:$0xff] %vm436, %v2831
      %2864 = vst.msk [vmem:[%s278 + $0xb8] sm:$0xff] %vm436, %v2832
      %2865 = vst.msk [vmem:[%s278 + $0xc0] sm:$0xff] %vm436, %v2833
      %2866 = vst.msk [vmem:[%s278 + $0xc8] sm:$0xff] %vm436, %v2834
      %2867 = vst.msk [vmem:[%s278 + $0xd0] sm:$0xff] %vm436, %v2835
      %2868 = vst.msk [vmem:[%s278 + $0xd8] sm:$0xff] %vm436, %v2836
      %2869 = vst.msk [vmem:[%s278 + $0xe0] sm:$0xff] %vm436, %v2837
      %2870 = vst.msk [vmem:[%s278 + $0xe8] sm:$0xff] %vm436, %v2838
      %2871 = vst.msk [vmem:[%s278 + $0xf0] sm:$0xff] %vm436, %v2839
      %2872 = vst.msk [vmem:[%s278 + $0xf8] sm:$0xff] %vm436, %v2840
      %p2873 = scmp.lt.s32.totalorder %s18, 1
      %s2874 = scalar_select %p2873, %s18, 1
      %s2875 = smul.addr %s2874, 32
      %s2876 = smul.addr %s2875, 8
      %s2877 = scalar_lea.vmem %s7, %s2876
      // Predicated region
      $region49: #{tpu_custom_call.1} parent=47 // pred_check
        %p2878 = pneg %p188
      $region50: #{tpu_custom_call.1} parent=47 // pred_check_branch
        %2880 = sbr.rel (%p2878) target = $region52
      $region51: #{tpu_custom_call.1} parent=47 // pred_region
        _
      $region52: #{tpu_custom_call.1} parent=47 // pred_fallthru
        _
    $region48: #{tpu_custom_call.1} parent=5 // pred_fallthru
      _
    %p2881 = scmp.le.s32.totalorder 2, %s13
    // Predicated region
    $region53: #{tpu_custom_call.1} parent=5 // pred_check
      %p2882 = pneg %p2881
    $region54: #{tpu_custom_call.1} parent=5 // pred_check_branch
      %2884 = sbr.rel (%p2882) target = $region56
    $region55: #{tpu_custom_call.1} parent=5 // pred_region
      %s2885 = ssub.s32 %s13, 2
      // Predicated region
      $region57: #{tpu_custom_call.1} parent=55 // pred_check
        %p2886 = pneg %p194
      $region58: #{tpu_custom_call.1} parent=55 // pred_check_branch
        %2888 = sbr.rel (%p2886) target = $region60
      $region59: #{tpu_custom_call.1} parent=55 // pred_region
        %p2889 = scmp.lt.s32.totalorder %s19, 1
        %s2890 = scalar_select %p2889, %s19, 1
        %s2891 = smul.addr %s2890, 32
        %s2892 = smul.addr %s2891, 8
        %s2893 = scalar_lea.vmem %s7, %s2892
      $region60: #{tpu_custom_call.1} parent=55 // pred_fallthru
        _
    $region56: #{tpu_custom_call.1} parent=5 // pred_fallthru
      _
  $region6: #{tpu_custom_call.1} parent=0 // loop_footer
    %s17 = sadd.s32 1, %s13
  $region7: #{tpu_custom_call.1} parent=0 // loop_footer_branch
    %12 = sbr.rel target = $region3
  $region8: #{tpu_custom_call.1} parent=0 // loop_exit
    _

</llo_original>
